<compile_context>
chip_gen: v7x
topology: tpu7x:2x2x1
jax: 0.10.0
libtpu: 0.0.40
codegen_flags: <defaults>
</compile_context>

<pallas_src>
import functools

import jax
import jax.numpy as jnp
from jax.experimental import pallas as pl
from jax.experimental.pallas import tpu as pltpu

_HEAD_LANES = 128  # lane-dense padded width of the 6-wide action head


# ----------------------------- small helpers --------------------------------
def _round_up(x, m):
    return -(-x // m) * m


def _device_kind():
    try:
        return jax.devices()[0].device_kind.lower()
    except Exception:
        return ""


def _has_bf16_valu():
    # bf16 VALU/EUP exist on v6e / v7x; v5e and older do elementwise in f32.
    kind = _device_kind()
    return ("v6" in kind) or ("v7" in kind)


def _default_epilogue_dtype():
    return jnp.bfloat16 if _has_bf16_valu() else jnp.float32


def _vmem_ceiling_bytes():
    # Generation-aware cap: ~0.75 of physical per-core VMEM (48 MiB on v7x,
    # 96 MiB on v5e/v6e).  Falls back to the smallest (v7x) if the query fails.
    try:
        cap = int(pltpu.get_tpu_info().vmem_capacity_bytes)
    except Exception:
        cap = 64 << 20
    return max(int(0.75 * cap), 32 << 20)


# ----------------------------- Pallas kernel --------------------------------
def _policy_kernel(x_ref,
                   w11, b11, w12, b12, w13, b13, w14, b14,   # MLP1
                   w21, b21, w22, b22, w23, b23, w24, b24,   # MLP2
                   wc, bc,                                    # conti head (lane-padded)
                   out_ref,
                   *, limit, ep_dtype):
    def matmul(h, w_ref):
        # bf16 operands into the MXU, f32 accumulation.
        return jnp.dot(h.astype(jnp.bfloat16), w_ref[...],
                       preferred_element_type=jnp.float32)

    def lin(h, w_ref, b_ref):
        # Bias-add (and the following ReLU) run in ep_dtype: bf16 on v6e/v7x
        # (packed VALU, half the activation traffic), f32 on v5e.
        return matmul(h, w_ref).astype(ep_dtype) + b_ref[...]

    h = x_ref[...]  # streamed in bf16; first matmul consumes it directly

    # MLP1 (get_mlp: last Linear has no ReLU)
    h = jax.nn.relu(lin(h, w11, b11))
    h = jax.nn.relu(lin(h, w12, b12))
    h = jax.nn.relu(lin(h, w13, b13))
    h = lin(h, w14, b14)

    # MLP2 (last Linear has no ReLU)
    h = jax.nn.relu(lin(h, w21, b21))
    h = jax.nn.relu(lin(h, w22, b22))
    h = jax.nn.relu(lin(h, w23, b23))
    h = lin(h, w24, b24)

    # Continuous-action head: f32 bias add + tanh (EUP) + scalar joint limit.
    # Lanes >= 6 are zero padding (tanh(0)*limit = 0), sliced off by wrapper.
    a = jnp.tanh(matmul(h, wc) + bc[...]) * limit
    out_ref[...] = a.astype(out_ref.dtype)


# ----------------------------- wrapper ---------------------------------------
def gaussian_policy_forward(state, params, *, block_b=None, max_joint_limit=0.15,
                            epilogue_dtype=None, single_buffer_weights=True):
    """state: (B, num_inputs) float32 -> (B, 6) float32."""
    B, I = state.shape
    ws, bs = list(params[0::2]), list(params[1::2])
    assert len(ws) == 9 and len(bs) == 9

    newer = _has_bf16_valu()
    if epilogue_dtype is None:
        epilogue_dtype = jnp.bfloat16 if newer else jnp.float32
    if block_b is None:
        block_b = 1024 if newer else 512

    # --- operands ------------------------------------------------------------
    # bf16 weights straight to the MXU; hidden-layer biases in the epilogue dtype.
    hidden_ws = [w.astype(jnp.bfloat16) for w in ws[:8]]
    hidden_bs = [b.reshape(1, -1).astype(epilogue_dtype) for b in bs[:8]]

    # Lane-dense padding of the 6-wide head to 128 lanes (avoids masked vst and
    # a degenerate N=6 MXU tile).
    wc = ws[8].astype(jnp.bfloat16)
    bc = bs[8].reshape(1, -1).astype(jnp.float32)
    wc_p = jnp.zeros((wc.shape[0], _HEAD_LANES), wc.dtype).at[:, :wc.shape[1]].set(wc)
    bc_p = jnp.zeros((1, _HEAD_LANES), bc.dtype).at[:, :bc.shape[1]].set(bc)

    # Batch tile: multiple of 8, capped at block_b, and at round_up(ceil(B/2),8)
    # so moderate batches still produce >= 2 grid steps (both v7x TCs get work
    # under dimension_semantics=("parallel",)).
    TB = min(int(block_b), _round_up(-(-B // 2), 8))
    TB = max(8, _round_up(TB, 8))
    Bp = _round_up(B, TB)

    # Stream the input in bf16 (half the per-row DMA / VMEM of f32).
    x = jnp.zeros((Bp, I), jnp.bfloat16).at[:B].set(state.astype(jnp.bfloat16))

    layer_operands = []
    for w, b in zip(hidden_ws, hidden_bs):
        layer_operands += [w, b]
    operands = (x,) + tuple(layer_operands) + (wc_p, bc_p)

    # --- VMEM budget / cost estimate ------------------------------------------
    weight_bytes = sum(int(a.size) * a.dtype.itemsize for a in operands[1:])
    max_width = max([I] + [int(w.shape[1]) for w in hidden_ws] + [_HEAD_LANES])
    io_block_bytes = TB * I * 2 + TB * _HEAD_LANES * 4

    def vmem_budget(single_buffer):
        wfac = 1 if single_buffer else 2            # resident weight buffering
        needed = (wfac * weight_bytes
                  + 2 * io_block_bytes              # double-buffered x / out tiles
                  + 8 * TB * max_width * 4)         # intermediate-activation headroom
        return int(min(max(needed, 32 << 20), _vmem_ceiling_bytes()))

    flops = 2 * Bp * (sum(int(w.shape[0]) * int(w.shape[1]) for w in hidden_ws)
                      + int(wc_p.shape[0]) * int(wc_p.shape[1]))
    bytes_accessed = int(x.size) * 2 + Bp * _HEAD_LANES * 4 + weight_bytes

    kernel = functools.partial(_policy_kernel, limit=float(max_joint_limit),
                               ep_dtype=epilogue_dtype)

    def _call(single_buffer):
        def resident_spec(arr):
            # Full-array block, constant index map: DMA'd once, VMEM-resident
            # across all batch tiles.  Constant blocks don't need double
            # buffering -> Buffered(1) halves the resident footprint (v7x).
            if single_buffer:
                return pl.BlockSpec(arr.shape, lambda i: (0, 0),
                                    pipeline_mode=pl.Buffered(1))
            return pl.BlockSpec(arr.shape, lambda i: (0, 0))

        in_specs = [pl.BlockSpec((TB, I), lambda i: (i, 0))]
        in_specs += [resident_spec(a) for a in operands[1:]]
        out_specs = pl.BlockSpec((TB, _HEAD_LANES), lambda i: (i, 0))

        out = pl.pallas_call(
            kernel,
            out_shape=jax.ShapeDtypeStruct((Bp, _HEAD_LANES), jnp.float32),
            grid=(Bp // TB,),
            in_specs=in_specs,
            out_specs=out_specs,
            compiler_params=pltpu.CompilerParams(
                dimension_semantics=("parallel",),
                vmem_limit_bytes=vmem_budget(single_buffer)),
            cost_estimate=pl.CostEstimate(
                flops=int(flops),
                transcendentals=int(Bp * _HEAD_LANES),
                bytes_accessed=int(bytes_accessed)),
        )(*operands)
        return jax.block_until_ready(out)

    if single_buffer_weights:
        try:
            out = _call(True)
        except Exception:
            # pipeline_mode=pl.Buffered(1) not supported on this build/chip:
            # fall back to default double-buffered constant blocks (identical
            # numerics, slightly larger resident VMEM footprint).
            out = _call(False)
    else:
        out = _call(False)

    return out[:B, :6]


# ----------------------------- parameter init --------------------------------
def _xavier_normal(key, fan_in, fan_out):
    std = (2.0 / (fan_in + fan_out)) ** 0.5
    # Weight stored as (in, out); same distribution as torch xavier_normal_.
    return std * jax.random.normal(key, (fan_in, fan_out), dtype=jnp.float32)


def make_params(key, num_inputs=512, hidden_dim=512, bias_scale=0.0):
    """bias_scale=0 matches the module's weights_init_ (zero biases); a nonzero
    value draws small random biases (learned biases are arbitrary at inference
    time) so the bias broadcast path is actually exercised by the self-test."""
    H = hidden_dim
    layer_dims = [
        # MLP1
        (num_inputs, H), (H, H), (H, H // 2), (H // 2, H),
        # MLP2
        (H, H // 2), (H // 2, H // 2), (H // 2, H // 4), (H // 4, H // 2),
        # conti head
        (H // 2, 6),
    ]
    params = []
    keys = jax.random.split(key, 2 * len(layer_dims))
    for n, (fi, fo) in enumerate(layer_dims):
        kw, kb = keys[2 * n], keys[2 * n + 1]
        params.append(_xavier_normal(kw, fi, fo).astype(jnp.bfloat16))
        if bias_scale:
            params.append(bias_scale * jax.random.normal(kb, (1, fo), dtype=jnp.float32))
        else:
            params.append(jnp.zeros((1, fo), dtype=jnp.float32))
    return tuple(params)


# pure-JAX reference: mirrors the kernel arithmetic exactly
# (bf16 MXU operands, f32 accumulation, epilogue in `epilogue_dtype`).
def _reference_forward(state, params, *, epilogue_dtype=jnp.float32,
                       max_joint_limit=0.15):
    ws, bs = list(params[0::2]), list(params[1::2])

    def matmul(h, w):
        return jnp.dot(h.astype(jnp.bfloat16), w.astype(jnp.bfloat16),
                       preferred_element_type=jnp.float32)

    h = state.astype(jnp.bfloat16)
    for idx in range(8):
        h = matmul(h, ws[idx]).astype(epilogue_dtype) \
            + bs[idx].reshape(1, -1).astype(epilogue_dtype)
        if idx not in (3, 7):       # last Linear of each get_mlp has no ReLU
            h = jax.nn.relu(h)
    y = matmul(h, ws[8]) + bs[8].reshape(1, -1).astype(jnp.float32)
    return jnp.tanh(y) * max_joint_limit


if __name__ == "__main__":
    # SMALL shapes consistent with the module's structure.
    NUM_INPUTS, HIDDEN = 128, 128
    BATCH = 2

    key = jax.random.PRNGKey(0)
    k_state, k_params = jax.random.split(key)

    state = jax.random.normal(k_state, (BATCH, NUM_INPUTS), dtype=jnp.float32)
    # Nonzero biases (review coverage concern): module init zeroes them, but
    # the forward must be correct for arbitrary learned biases.
    params = make_params(k_params, num_inputs=NUM_INPUTS, hidden_dim=HIDDEN,
                         bias_scale=0.05)

    ep_dtype = _default_epilogue_dtype()

    out = gaussian_policy_forward(state, params, epilogue_dtype=ep_dtype)
    out = jax.block_until_ready(out)

    ref = _reference_forward(state, params, epilogue_dtype=ep_dtype)
    assert out.shape == (BATCH, 6)
    max_err = float(jnp.max(jnp.abs(out - ref)))
    assert jnp.allclose(out, ref, atol=5e-3, rtol=2e-2), max_err

    print("KERNEL_OK")
</pallas_src>

<mosaic_0001>
module attributes {stable_mosaic.version = 11 : i64} {
  func.func @_policy_kernel(%arg0: i32, %arg1: memref<8x128xbf16, #tpu.memory_space<vmem>>, %arg2: memref<128x128xbf16, #tpu.memory_space<vmem>>, %arg3: memref<1x128xf32, #tpu.memory_space<vmem>>, %arg4: memref<128x128xbf16, #tpu.memory_space<vmem>>, %arg5: memref<1x128xf32, #tpu.memory_space<vmem>>, %arg6: memref<128x64xbf16, #tpu.memory_space<vmem>>, %arg7: memref<1x64xf32, #tpu.memory_space<vmem>>, %arg8: memref<64x128xbf16, #tpu.memory_space<vmem>>, %arg9: memref<1x128xf32, #tpu.memory_space<vmem>>, %arg10: memref<128x64xbf16, #tpu.memory_space<vmem>>, %arg11: memref<1x64xf32, #tpu.memory_space<vmem>>, %arg12: memref<64x64xbf16, #tpu.memory_space<vmem>>, %arg13: memref<1x64xf32, #tpu.memory_space<vmem>>, %arg14: memref<64x32xbf16, #tpu.memory_space<vmem>>, %arg15: memref<1x32xf32, #tpu.memory_space<vmem>>, %arg16: memref<32x64xbf16, #tpu.memory_space<vmem>>, %arg17: memref<1x64xf32, #tpu.memory_space<vmem>>, %arg18: memref<64x128xbf16, #tpu.memory_space<vmem>>, %arg19: memref<1x128xf32, #tpu.memory_space<vmem>>, %arg20: memref<8x128xf32, #tpu.memory_space<vmem>>) attributes {dimension_semantics = [#tpu.dimension_semantics<parallel>], iteration_bounds = array<i64: 1>, scalar_prefetch = 0 : i64, scratch_operands = 0 : i64, tpu.core_type = #tpu.core_type<tc>, window_params = [{transform_indices = @transform_0, window_bounds = array<i64: 8, 128>}, {pipeline_mode = #tpu.pipeline_mode<synchronous>, transform_indices = @transform_1, window_bounds = array<i64: 128, 128>}, {pipeline_mode = #tpu.pipeline_mode<synchronous>, transform_indices = @transform_2, window_bounds = array<i64: 1, 128>}, {pipeline_mode = #tpu.pipeline_mode<synchronous>, transform_indices = @transform_3, window_bounds = array<i64: 128, 128>}, {pipeline_mode = #tpu.pipeline_mode<synchronous>, transform_indices = @transform_4, window_bounds = array<i64: 1, 128>}, {pipeline_mode = #tpu.pipeline_mode<synchronous>, transform_indices = @transform_5, window_bounds = array<i64: 128, 64>}, {pipeline_mode = #tpu.pipeline_mode<synchronous>, transform_indices = @transform_6, window_bounds = array<i64: 1, 64>}, {pipeline_mode = #tpu.pipeline_mode<synchronous>, transform_indices = @transform_7, window_bounds = array<i64: 64, 128>}, {pipeline_mode = #tpu.pipeline_mode<synchronous>, transform_indices = @transform_8, window_bounds = array<i64: 1, 128>}, {pipeline_mode = #tpu.pipeline_mode<synchronous>, transform_indices = @transform_9, window_bounds = array<i64: 128, 64>}, {pipeline_mode = #tpu.pipeline_mode<synchronous>, transform_indices = @transform_10, window_bounds = array<i64: 1, 64>}, {pipeline_mode = #tpu.pipeline_mode<synchronous>, transform_indices = @transform_11, window_bounds = array<i64: 64, 64>}, {pipeline_mode = #tpu.pipeline_mode<synchronous>, transform_indices = @transform_12, window_bounds = array<i64: 1, 64>}, {pipeline_mode = #tpu.pipeline_mode<synchronous>, transform_indices = @transform_13, window_bounds = array<i64: 64, 32>}, {pipeline_mode = #tpu.pipeline_mode<synchronous>, transform_indices = @transform_14, window_bounds = array<i64: 1, 32>}, {pipeline_mode = #tpu.pipeline_mode<synchronous>, transform_indices = @transform_15, window_bounds = array<i64: 32, 64>}, {pipeline_mode = #tpu.pipeline_mode<synchronous>, transform_indices = @transform_16, window_bounds = array<i64: 1, 64>}, {pipeline_mode = #tpu.pipeline_mode<synchronous>, transform_indices = @transform_17, window_bounds = array<i64: 64, 128>}, {pipeline_mode = #tpu.pipeline_mode<synchronous>, transform_indices = @transform_18, window_bounds = array<i64: 1, 128>}, {transform_indices = @transform_19, window_bounds = array<i64: 8, 128>}]} {
    %c0 = arith.constant 0 : index
    %c0_0 = arith.constant 0 : index
    %0 = vector.load %arg1[%c0, %c0_0] : memref<8x128xbf16, #tpu.memory_space<vmem>>, vector<8x128xbf16>
    %c0_1 = arith.constant 0 : index
    %c0_2 = arith.constant 0 : index
    %1 = vector.load %arg2[%c0_1, %c0_2] : memref<128x128xbf16, #tpu.memory_space<vmem>>, vector<128x128xbf16>
    %cst = arith.constant dense<0.000000e+00> : vector<8x128xf32>
    %2 = tpu.matmul %0, %1, %cst {dimension_numbers = #tpu.dot_dimension_numbers<[1], [0], [0], [1], [0, 0, 1, 1], [], []>} : vector<8x128xbf16>, vector<128x128xbf16>, vector<8x128xf32> -> vector<8x128xf32>
    %c0_3 = arith.constant 0 : index
    %c0_4 = arith.constant 0 : index
    %3 = vector.load %arg3[%c0_3, %c0_4] : memref<1x128xf32, #tpu.memory_space<vmem>>, vector<1x128xf32>
    %4 = vector.broadcast %3 : vector<1x128xf32> to vector<8x128xf32>
    %5 = arith.addf %2, %4 : vector<8x128xf32>
    %cst_5 = arith.constant 0.000000e+00 : f32
    %6 = vector.broadcast %cst_5 : f32 to vector<8x128xf32>
    %7 = arith.maximumf %5, %6 : vector<8x128xf32>
    %8 = arith.truncf %7 : vector<8x128xf32> to vector<8x128xbf16>
    %c0_6 = arith.constant 0 : index
    %c0_7 = arith.constant 0 : index
    %9 = vector.load %arg4[%c0_6, %c0_7] : memref<128x128xbf16, #tpu.memory_space<vmem>>, vector<128x128xbf16>
    %cst_8 = arith.constant dense<0.000000e+00> : vector<8x128xf32>
    %10 = tpu.matmul %8, %9, %cst_8 {dimension_numbers = #tpu.dot_dimension_numbers<[1], [0], [0], [1], [0, 0, 1, 1], [], []>} : vector<8x128xbf16>, vector<128x128xbf16>, vector<8x128xf32> -> vector<8x128xf32>
    %c0_9 = arith.constant 0 : index
    %c0_10 = arith.constant 0 : index
    %11 = vector.load %arg5[%c0_9, %c0_10] : memref<1x128xf32, #tpu.memory_space<vmem>>, vector<1x128xf32>
    %12 = vector.broadcast %11 : vector<1x128xf32> to vector<8x128xf32>
    %13 = arith.addf %10, %12 : vector<8x128xf32>
    %cst_11 = arith.constant 0.000000e+00 : f32
    %14 = vector.broadcast %cst_11 : f32 to vector<8x128xf32>
    %15 = arith.maximumf %13, %14 : vector<8x128xf32>
    %16 = arith.truncf %15 : vector<8x128xf32> to vector<8x128xbf16>
    %c0_12 = arith.constant 0 : index
    %c0_13 = arith.constant 0 : index
    %17 = vector.load %arg6[%c0_12, %c0_13] : memref<128x64xbf16, #tpu.memory_space<vmem>>, vector<128x64xbf16>
    %cst_14 = arith.constant dense<0.000000e+00> : vector<8x64xf32>
    %18 = tpu.matmul %16, %17, %cst_14 {dimension_numbers = #tpu.dot_dimension_numbers<[1], [0], [0], [1], [0, 0, 1, 1], [], []>} : vector<8x128xbf16>, vector<128x64xbf16>, vector<8x64xf32> -> vector<8x64xf32>
    %c0_15 = arith.constant 0 : index
    %c0_16 = arith.constant 0 : index
    %19 = vector.load %arg7[%c0_15, %c0_16] : memref<1x64xf32, #tpu.memory_space<vmem>>, vector<1x64xf32>
    %20 = vector.broadcast %19 : vector<1x64xf32> to vector<8x64xf32>
    %21 = arith.addf %18, %20 : vector<8x64xf32>
    %cst_17 = arith.constant 0.000000e+00 : f32
    %22 = vector.broadcast %cst_17 : f32 to vector<8x64xf32>
    %23 = arith.maximumf %21, %22 : vector<8x64xf32>
    %24 = arith.truncf %23 : vector<8x64xf32> to vector<8x64xbf16>
    %c0_18 = arith.constant 0 : index
    %c0_19 = arith.constant 0 : index
    %25 = vector.load %arg8[%c0_18, %c0_19] : memref<64x128xbf16, #tpu.memory_space<vmem>>, vector<64x128xbf16>
    %cst_20 = arith.constant dense<0.000000e+00> : vector<8x128xf32>
    %26 = tpu.matmul %24, %25, %cst_20 {dimension_numbers = #tpu.dot_dimension_numbers<[1], [0], [0], [1], [0, 0, 1, 1], [], []>} : vector<8x64xbf16>, vector<64x128xbf16>, vector<8x128xf32> -> vector<8x128xf32>
    %c0_21 = arith.constant 0 : index
    %c0_22 = arith.constant 0 : index
    %27 = vector.load %arg9[%c0_21, %c0_22] : memref<1x128xf32, #tpu.memory_space<vmem>>, vector<1x128xf32>
    %28 = vector.broadcast %27 : vector<1x128xf32> to vector<8x128xf32>
    %29 = arith.addf %26, %28 : vector<8x128xf32>
    %30 = arith.truncf %29 : vector<8x128xf32> to vector<8x128xbf16>
    %c0_23 = arith.constant 0 : index
    %c0_24 = arith.constant 0 : index
    %31 = vector.load %arg10[%c0_23, %c0_24] : memref<128x64xbf16, #tpu.memory_space<vmem>>, vector<128x64xbf16>
    %cst_25 = arith.constant dense<0.000000e+00> : vector<8x64xf32>
    %32 = tpu.matmul %30, %31, %cst_25 {dimension_numbers = #tpu.dot_dimension_numbers<[1], [0], [0], [1], [0, 0, 1, 1], [], []>} : vector<8x128xbf16>, vector<128x64xbf16>, vector<8x64xf32> -> vector<8x64xf32>
    %c0_26 = arith.constant 0 : index
    %c0_27 = arith.constant 0 : index
    %33 = vector.load %arg11[%c0_26, %c0_27] : memref<1x64xf32, #tpu.memory_space<vmem>>, vector<1x64xf32>
    %34 = vector.broadcast %33 : vector<1x64xf32> to vector<8x64xf32>
    %35 = arith.addf %32, %34 : vector<8x64xf32>
    %cst_28 = arith.constant 0.000000e+00 : f32
    %36 = vector.broadcast %cst_28 : f32 to vector<8x64xf32>
    %37 = arith.maximumf %35, %36 : vector<8x64xf32>
    %38 = arith.truncf %37 : vector<8x64xf32> to vector<8x64xbf16>
    %c0_29 = arith.constant 0 : index
    %c0_30 = arith.constant 0 : index
    %39 = vector.load %arg12[%c0_29, %c0_30] : memref<64x64xbf16, #tpu.memory_space<vmem>>, vector<64x64xbf16>
    %cst_31 = arith.constant dense<0.000000e+00> : vector<8x64xf32>
    %40 = tpu.matmul %38, %39, %cst_31 {dimension_numbers = #tpu.dot_dimension_numbers<[1], [0], [0], [1], [0, 0, 1, 1], [], []>} : vector<8x64xbf16>, vector<64x64xbf16>, vector<8x64xf32> -> vector<8x64xf32>
    %c0_32 = arith.constant 0 : index
    %c0_33 = arith.constant 0 : index
    %41 = vector.load %arg13[%c0_32, %c0_33] : memref<1x64xf32, #tpu.memory_space<vmem>>, vector<1x64xf32>
    %42 = vector.broadcast %41 : vector<1x64xf32> to vector<8x64xf32>
    %43 = arith.addf %40, %42 : vector<8x64xf32>
    %cst_34 = arith.constant 0.000000e+00 : f32
    %44 = vector.broadcast %cst_34 : f32 to vector<8x64xf32>
    %45 = arith.maximumf %43, %44 : vector<8x64xf32>
    %46 = arith.truncf %45 : vector<8x64xf32> to vector<8x64xbf16>
    %c0_35 = arith.constant 0 : index
    %c0_36 = arith.constant 0 : index
    %47 = vector.load %arg14[%c0_35, %c0_36] : memref<64x32xbf16, #tpu.memory_space<vmem>>, vector<64x32xbf16>
    %cst_37 = arith.constant dense<0.000000e+00> : vector<8x32xf32>
    %48 = tpu.matmul %46, %47, %cst_37 {dimension_numbers = #tpu.dot_dimension_numbers<[1], [0], [0], [1], [0, 0, 1, 1], [], []>} : vector<8x64xbf16>, vector<64x32xbf16>, vector<8x32xf32> -> vector<8x32xf32>
    %c0_38 = arith.constant 0 : index
    %c0_39 = arith.constant 0 : index
    %49 = vector.load %arg15[%c0_38, %c0_39] : memref<1x32xf32, #tpu.memory_space<vmem>>, vector<1x32xf32>
    %50 = vector.broadcast %49 : vector<1x32xf32> to vector<8x32xf32>
    %51 = arith.addf %48, %50 : vector<8x32xf32>
    %cst_40 = arith.constant 0.000000e+00 : f32
    %52 = vector.broadcast %cst_40 : f32 to vector<8x32xf32>
    %53 = arith.maximumf %51, %52 : vector<8x32xf32>
    %54 = arith.truncf %53 : vector<8x32xf32> to vector<8x32xbf16>
    %c0_41 = arith.constant 0 : index
    %c0_42 = arith.constant 0 : index
    %55 = vector.load %arg16[%c0_41, %c0_42] : memref<32x64xbf16, #tpu.memory_space<vmem>>, vector<32x64xbf16>
    %cst_43 = arith.constant dense<0.000000e+00> : vector<8x64xf32>
    %56 = tpu.matmul %54, %55, %cst_43 {dimension_numbers = #tpu.dot_dimension_numbers<[1], [0], [0], [1], [0, 0, 1, 1], [], []>} : vector<8x32xbf16>, vector<32x64xbf16>, vector<8x64xf32> -> vector<8x64xf32>
    %c0_44 = arith.constant 0 : index
    %c0_45 = arith.constant 0 : index
    %57 = vector.load %arg17[%c0_44, %c0_45] : memref<1x64xf32, #tpu.memory_space<vmem>>, vector<1x64xf32>
    %58 = vector.broadcast %57 : vector<1x64xf32> to vector<8x64xf32>
    %59 = arith.addf %56, %58 : vector<8x64xf32>
    %60 = arith.truncf %59 : vector<8x64xf32> to vector<8x64xbf16>
    %c0_46 = arith.constant 0 : index
    %c0_47 = arith.constant 0 : index
    %61 = vector.load %arg18[%c0_46, %c0_47] : memref<64x128xbf16, #tpu.memory_space<vmem>>, vector<64x128xbf16>
    %cst_48 = arith.constant dense<0.000000e+00> : vector<8x128xf32>
    %62 = tpu.matmul %60, %61, %cst_48 {dimension_numbers = #tpu.dot_dimension_numbers<[1], [0], [0], [1], [0, 0, 1, 1], [], []>} : vector<8x64xbf16>, vector<64x128xbf16>, vector<8x128xf32> -> vector<8x128xf32>
    %c0_49 = arith.constant 0 : index
    %c0_50 = arith.constant 0 : index
    %63 = vector.load %arg19[%c0_49, %c0_50] : memref<1x128xf32, #tpu.memory_space<vmem>>, vector<1x128xf32>
    %64 = vector.broadcast %63 : vector<1x128xf32> to vector<8x128xf32>
    %65 = arith.addf %62, %64 : vector<8x128xf32>
    %66 = math.tanh %65 : vector<8x128xf32>
    %cst_51 = arith.constant 1.500000e-01 : f32
    %67 = vector.broadcast %cst_51 : f32 to vector<8x128xf32>
    %68 = arith.mulf %66, %67 : vector<8x128xf32>
    %c0_52 = arith.constant 0 : index
    %c0_53 = arith.constant 0 : index
    %69 = vector.load %arg20[%c0_52, %c0_53] : memref<8x128xf32, #tpu.memory_space<vmem>>, vector<8x128xf32>
    tpu.vector_store %arg20[%c0_52, %c0_53], %68 {strides = array<i32>} : memref<8x128xf32, #tpu.memory_space<vmem>>, vector<8x128xf32>,
    return
  }
  func.func @transform_0(%arg0: i32) -> (i32, i32) {
    %c0_i32 = arith.constant 0 : i32
    %c0_i32_0 = arith.constant 0 : i32
    return %arg0, %c0_i32 : i32, i32
  }
  func.func @transform_1(%arg0: i32) -> (i32, i32) {
    %c0_i32 = arith.constant 0 : i32
    %c0_i32_0 = arith.constant 0 : i32
    %c0_i32_1 = arith.constant 0 : i32
    return %c0_i32, %c0_i32_0 : i32, i32
  }
  func.func @transform_2(%arg0: i32) -> (i32, i32) {
    %c0_i32 = arith.constant 0 : i32
    %c0_i32_0 = arith.constant 0 : i32
    %c0_i32_1 = arith.constant 0 : i32
    return %c0_i32, %c0_i32_0 : i32, i32
  }
  func.func @transform_3(%arg0: i32) -> (i32, i32) {
    %c0_i32 = arith.constant 0 : i32
    %c0_i32_0 = arith.constant 0 : i32
    %c0_i32_1 = arith.constant 0 : i32
    return %c0_i32, %c0_i32_0 : i32, i32
  }
  func.func @transform_4(%arg0: i32) -> (i32, i32) {
    %c0_i32 = arith.constant 0 : i32
    %c0_i32_0 = arith.constant 0 : i32
    %c0_i32_1 = arith.constant 0 : i32
    return %c0_i32, %c0_i32_0 : i32, i32
  }
  func.func @transform_5(%arg0: i32) -> (i32, i32) {
    %c0_i32 = arith.constant 0 : i32
    %c0_i32_0 = arith.constant 0 : i32
    %c0_i32_1 = arith.constant 0 : i32
    return %c0_i32, %c0_i32_0 : i32, i32
  }
  func.func @transform_6(%arg0: i32) -> (i32, i32) {
    %c0_i32 = arith.constant 0 : i32
    %c0_i32_0 = arith.constant 0 : i32
    %c0_i32_1 = arith.constant 0 : i32
    return %c0_i32, %c0_i32_0 : i32, i32
  }
  func.func @transform_7(%arg0: i32) -> (i32, i32) {
    %c0_i32 = arith.constant 0 : i32
    %c0_i32_0 = arith.constant 0 : i32
    %c0_i32_1 = arith.constant 0 : i32
    return %c0_i32, %c0_i32_0 : i32, i32
  }
  func.func @transform_8(%arg0: i32) -> (i32, i32) {
    %c0_i32 = arith.constant 0 : i32
    %c0_i32_0 = arith.constant 0 : i32
    %c0_i32_1 = arith.constant 0 : i32
    return %c0_i32, %c0_i32_0 : i32, i32
  }
  func.func @transform_9(%arg0: i32) -> (i32, i32) {
    %c0_i32 = arith.constant 0 : i32
    %c0_i32_0 = arith.constant 0 : i32
    %c0_i32_1 = arith.constant 0 : i32
    return %c0_i32, %c0_i32_0 : i32, i32
  }
  func.func @transform_10(%arg0: i32) -> (i32, i32) {
    %c0_i32 = arith.constant 0 : i32
    %c0_i32_0 = arith.constant 0 : i32
    %c0_i32_1 = arith.constant 0 : i32
    return %c0_i32, %c0_i32_0 : i32, i32
  }
  func.func @transform_11(%arg0: i32) -> (i32, i32) {
    %c0_i32 = arith.constant 0 : i32
    %c0_i32_0 = arith.constant 0 : i32
    %c0_i32_1 = arith.constant 0 : i32
    return %c0_i32, %c0_i32_0 : i32, i32
  }
  func.func @transform_12(%arg0: i32) -> (i32, i32) {
    %c0_i32 = arith.constant 0 : i32
    %c0_i32_0 = arith.constant 0 : i32
    %c0_i32_1 = arith.constant 0 : i32
    return %c0_i32, %c0_i32_0 : i32, i32
  }
  func.func @transform_13(%arg0: i32) -> (i32, i32) {
    %c0_i32 = arith.constant 0 : i32
    %c0_i32_0 = arith.constant 0 : i32
    %c0_i32_1 = arith.constant 0 : i32
    return %c0_i32, %c0_i32_0 : i32, i32
  }
  func.func @transform_14(%arg0: i32) -> (i32, i32) {
    %c0_i32 = arith.constant 0 : i32
    %c0_i32_0 = arith.constant 0 : i32
    %c0_i32_1 = arith.constant 0 : i32
    return %c0_i32, %c0_i32_0 : i32, i32
  }
  func.func @transform_15(%arg0: i32) -> (i32, i32) {
    %c0_i32 = arith.constant 0 : i32
    %c0_i32_0 = arith.constant 0 : i32
    %c0_i32_1 = arith.constant 0 : i32
    return %c0_i32, %c0_i32_0 : i32, i32
  }
  func.func @transform_16(%arg0: i32) -> (i32, i32) {
    %c0_i32 = arith.constant 0 : i32
    %c0_i32_0 = arith.constant 0 : i32
    %c0_i32_1 = arith.constant 0 : i32
    return %c0_i32, %c0_i32_0 : i32, i32
  }
  func.func @transform_17(%arg0: i32) -> (i32, i32) {
    %c0_i32 = arith.constant 0 : i32
    %c0_i32_0 = arith.constant 0 : i32
    %c0_i32_1 = arith.constant 0 : i32
    return %c0_i32, %c0_i32_0 : i32, i32
  }
  func.func @transform_18(%arg0: i32) -> (i32, i32) {
    %c0_i32 = arith.constant 0 : i32
    %c0_i32_0 = arith.constant 0 : i32
    %c0_i32_1 = arith.constant 0 : i32
    return %c0_i32, %c0_i32_0 : i32, i32
  }
  func.func @transform_19(%arg0: i32) -> (i32, i32) {
    %c0_i32 = arith.constant 0 : i32
    %c0_i32_0 = arith.constant 0 : i32
    return %arg0, %c0_i32 : i32, i32
  }
}

module attributes {stable_mosaic.version = 11 : i64} {
  func.func @_policy_kernel(%arg0: i32, %arg1: memref<8x128xbf16, #tpu.memory_space<vmem>>, %arg2: memref<128x128xbf16, #tpu.memory_space<vmem>>, %arg3: memref<1x128xf32, #tpu.memory_space<vmem>>, %arg4: memref<128x128xbf16, #tpu.memory_space<vmem>>, %arg5: memref<1x128xf32, #tpu.memory_space<vmem>>, %arg6: memref<128x64xbf16, #tpu.memory_space<vmem>>, %arg7: memref<1x64xf32, #tpu.memory_space<vmem>>, %arg8: memref<64x128xbf16, #tpu.memory_space<vmem>>, %arg9: memref<1x128xf32, #tpu.memory_space<vmem>>, %arg10: memref<128x64xbf16, #tpu.memory_space<vmem>>, %arg11: memref<1x64xf32, #tpu.memory_space<vmem>>, %arg12: memref<64x64xbf16, #tpu.memory_space<vmem>>, %arg13: memref<1x64xf32, #tpu.memory_space<vmem>>, %arg14: memref<64x32xbf16, #tpu.memory_space<vmem>>, %arg15: memref<1x32xf32, #tpu.memory_space<vmem>>, %arg16: memref<32x64xbf16, #tpu.memory_space<vmem>>, %arg17: memref<1x64xf32, #tpu.memory_space<vmem>>, %arg18: memref<64x128xbf16, #tpu.memory_space<vmem>>, %arg19: memref<1x128xf32, #tpu.memory_space<vmem>>, %arg20: memref<8x128xf32, #tpu.memory_space<vmem>>) attributes {dimension_semantics = [#tpu.dimension_semantics<parallel>], iteration_bounds = array<i64: 1>, scalar_prefetch = 0 : i64, scratch_operands = 0 : i64, tpu.core_type = #tpu.core_type<tc>, window_params = [{transform_indices = @transform_0, window_bounds = array<i64: 8, 128>}, {pipeline_mode = #tpu.pipeline_mode<synchronous>, transform_indices = @transform_1, window_bounds = array<i64: 128, 128>}, {pipeline_mode = #tpu.pipeline_mode<synchronous>, transform_indices = @transform_2, window_bounds = array<i64: 1, 128>}, {pipeline_mode = #tpu.pipeline_mode<synchronous>, transform_indices = @transform_3, window_bounds = array<i64: 128, 128>}, {pipeline_mode = #tpu.pipeline_mode<synchronous>, transform_indices = @transform_4, window_bounds = array<i64: 1, 128>}, {pipeline_mode = #tpu.pipeline_mode<synchronous>, transform_indices = @transform_5, window_bounds = array<i64: 128, 64>}, {pipeline_mode = #tpu.pipeline_mode<synchronous>, transform_indices = @transform_6, window_bounds = array<i64: 1, 64>}, {pipeline_mode = #tpu.pipeline_mode<synchronous>, transform_indices = @transform_7, window_bounds = array<i64: 64, 128>}, {pipeline_mode = #tpu.pipeline_mode<synchronous>, transform_indices = @transform_8, window_bounds = array<i64: 1, 128>}, {pipeline_mode = #tpu.pipeline_mode<synchronous>, transform_indices = @transform_9, window_bounds = array<i64: 128, 64>}, {pipeline_mode = #tpu.pipeline_mode<synchronous>, transform_indices = @transform_10, window_bounds = array<i64: 1, 64>}, {pipeline_mode = #tpu.pipeline_mode<synchronous>, transform_indices = @transform_11, window_bounds = array<i64: 64, 64>}, {pipeline_mode = #tpu.pipeline_mode<synchronous>, transform_indices = @transform_12, window_bounds = array<i64: 1, 64>}, {pipeline_mode = #tpu.pipeline_mode<synchronous>, transform_indices = @transform_13, window_bounds = array<i64: 64, 32>}, {pipeline_mode = #tpu.pipeline_mode<synchronous>, transform_indices = @transform_14, window_bounds = array<i64: 1, 32>}, {pipeline_mode = #tpu.pipeline_mode<synchronous>, transform_indices = @transform_15, window_bounds = array<i64: 32, 64>}, {pipeline_mode = #tpu.pipeline_mode<synchronous>, transform_indices = @transform_16, window_bounds = array<i64: 1, 64>}, {pipeline_mode = #tpu.pipeline_mode<synchronous>, transform_indices = @transform_17, window_bounds = array<i64: 64, 128>}, {pipeline_mode = #tpu.pipeline_mode<synchronous>, transform_indices = @transform_18, window_bounds = array<i64: 1, 128>}, {transform_indices = @transform_19, window_bounds = array<i64: 8, 128>}]} {
    %c0 = arith.constant 0 : index
    %c0_0 = arith.constant 0 : index
    %0 = vector.load %arg1[%c0, %c0_0] : memref<8x128xbf16, #tpu.memory_space<vmem>>, vector<8x128xbf16>
    %c0_1 = arith.constant 0 : index
    %c0_2 = arith.constant 0 : index
    %1 = vector.load %arg2[%c0_1, %c0_2] : memref<128x128xbf16, #tpu.memory_space<vmem>>, vector<128x128xbf16>
    %cst = arith.constant dense<0.000000e+00> : vector<8x128xf32>
    %2 = tpu.matmul %0, %1, %cst {dimension_numbers = #tpu.dot_dimension_numbers<[1], [0], [0], [1], [0, 0, 1, 1], [], []>} : vector<8x128xbf16>, vector<128x128xbf16>, vector<8x128xf32> -> vector<8x128xf32>
    %c0_3 = arith.constant 0 : index
    %c0_4 = arith.constant 0 : index
    %3 = vector.load %arg3[%c0_3, %c0_4] : memref<1x128xf32, #tpu.memory_space<vmem>>, vector<1x128xf32>
    %4 = vector.broadcast %3 : vector<1x128xf32> to vector<8x128xf32>
    %5 = arith.addf %2, %4 : vector<8x128xf32>
    %cst_5 = arith.constant 0.000000e+00 : f32
    %6 = vector.broadcast %cst_5 : f32 to vector<8x128xf32>
    %7 = arith.maximumf %5, %6 : vector<8x128xf32>
    %8 = arith.truncf %7 : vector<8x128xf32> to vector<8x128xbf16>
    %c0_6 = arith.constant 0 : index
    %c0_7 = arith.constant 0 : index
    %9 = vector.load %arg4[%c0_6, %c0_7] : memref<128x128xbf16, #tpu.memory_space<vmem>>, vector<128x128xbf16>
    %cst_8 = arith.constant dense<0.000000e+00> : vector<8x128xf32>
    %10 = tpu.matmul %8, %9, %cst_8 {dimension_numbers = #tpu.dot_dimension_numbers<[1], [0], [0], [1], [0, 0, 1, 1], [], []>} : vector<8x128xbf16>, vector<128x128xbf16>, vector<8x128xf32> -> vector<8x128xf32>
    %c0_9 = arith.constant 0 : index
    %c0_10 = arith.constant 0 : index
    %11 = vector.load %arg5[%c0_9, %c0_10] : memref<1x128xf32, #tpu.memory_space<vmem>>, vector<1x128xf32>
    %12 = vector.broadcast %11 : vector<1x128xf32> to vector<8x128xf32>
    %13 = arith.addf %10, %12 : vector<8x128xf32>
    %cst_11 = arith.constant 0.000000e+00 : f32
    %14 = vector.broadcast %cst_11 : f32 to vector<8x128xf32>
    %15 = arith.maximumf %13, %14 : vector<8x128xf32>
    %16 = arith.truncf %15 : vector<8x128xf32> to vector<8x128xbf16>
    %c0_12 = arith.constant 0 : index
    %c0_13 = arith.constant 0 : index
    %17 = vector.load %arg6[%c0_12, %c0_13] : memref<128x64xbf16, #tpu.memory_space<vmem>>, vector<128x64xbf16>
    %cst_14 = arith.constant dense<0.000000e+00> : vector<8x64xf32>
    %18 = tpu.matmul %16, %17, %cst_14 {dimension_numbers = #tpu.dot_dimension_numbers<[1], [0], [0], [1], [0, 0, 1, 1], [], []>} : vector<8x128xbf16>, vector<128x64xbf16>, vector<8x64xf32> -> vector<8x64xf32>
    %c0_15 = arith.constant 0 : index
    %c0_16 = arith.constant 0 : index
    %19 = vector.load %arg7[%c0_15, %c0_16] : memref<1x64xf32, #tpu.memory_space<vmem>>, vector<1x64xf32>
    %20 = vector.broadcast %19 : vector<1x64xf32> to vector<8x64xf32>
    %21 = arith.addf %18, %20 : vector<8x64xf32>
    %cst_17 = arith.constant 0.000000e+00 : f32
    %22 = vector.broadcast %cst_17 : f32 to vector<8x64xf32>
    %23 = arith.maximumf %21, %22 : vector<8x64xf32>
    %24 = arith.truncf %23 : vector<8x64xf32> to vector<8x64xbf16>
    %c0_18 = arith.constant 0 : index
    %c0_19 = arith.constant 0 : index
    %25 = vector.load %arg8[%c0_18, %c0_19] : memref<64x128xbf16, #tpu.memory_space<vmem>>, vector<64x128xbf16>
    %cst_20 = arith.constant dense<0.000000e+00> : vector<8x128xf32>
    %26 = tpu.matmul %24, %25, %cst_20 {dimension_numbers = #tpu.dot_dimension_numbers<[1], [0], [0], [1], [0, 0, 1, 1], [], []>} : vector<8x64xbf16>, vector<64x128xbf16>, vector<8x128xf32> -> vector<8x128xf32>
    %c0_21 = arith.constant 0 : index
    %c0_22 = arith.constant 0 : index
    %27 = vector.load %arg9[%c0_21, %c0_22] : memref<1x128xf32, #tpu.memory_space<vmem>>, vector<1x128xf32>
    %28 = vector.broadcast %27 : vector<1x128xf32> to vector<8x128xf32>
    %29 = arith.addf %26, %28 : vector<8x128xf32>
    %30 = arith.truncf %29 : vector<8x128xf32> to vector<8x128xbf16>
    %c0_23 = arith.constant 0 : index
    %c0_24 = arith.constant 0 : index
    %31 = vector.load %arg10[%c0_23, %c0_24] : memref<128x64xbf16, #tpu.memory_space<vmem>>, vector<128x64xbf16>
    %cst_25 = arith.constant dense<0.000000e+00> : vector<8x64xf32>
    %32 = tpu.matmul %30, %31, %cst_25 {dimension_numbers = #tpu.dot_dimension_numbers<[1], [0], [0], [1], [0, 0, 1, 1], [], []>} : vector<8x128xbf16>, vector<128x64xbf16>, vector<8x64xf32> -> vector<8x64xf32>
    %c0_26 = arith.constant 0 : index
    %c0_27 = arith.constant 0 : index
    %33 = vector.load %arg11[%c0_26, %c0_27] : memref<1x64xf32, #tpu.memory_space<vmem>>, vector<1x64xf32>
    %34 = vector.broadcast %33 : vector<1x64xf32> to vector<8x64xf32>
    %35 = arith.addf %32, %34 : vector<8x64xf32>
    %cst_28 = arith.constant 0.000000e+00 : f32
    %36 = vector.broadcast %cst_28 : f32 to vector<8x64xf32>
    %37 = arith.maximumf %35, %36 : vector<8x64xf32>
    %38 = arith.truncf %37 : vector<8x64xf32> to vector<8x64xbf16>
    %c0_29 = arith.constant 0 : index
    %c0_30 = arith.constant 0 : index
    %39 = vector.load %arg12[%c0_29, %c0_30] : memref<64x64xbf16, #tpu.memory_space<vmem>>, vector<64x64xbf16>
    %cst_31 = arith.constant dense<0.000000e+00> : vector<8x64xf32>
    %40 = tpu.matmul %38, %39, %cst_31 {dimension_numbers = #tpu.dot_dimension_numbers<[1], [0], [0], [1], [0, 0, 1, 1], [], []>} : vector<8x64xbf16>, vector<64x64xbf16>, vector<8x64xf32> -> vector<8x64xf32>
    %c0_32 = arith.constant 0 : index
    %c0_33 = arith.constant 0 : index
    %41 = vector.load %arg13[%c0_32, %c0_33] : memref<1x64xf32, #tpu.memory_space<vmem>>, vector<1x64xf32>
    %42 = vector.broadcast %41 : vector<1x64xf32> to vector<8x64xf32>
    %43 = arith.addf %40, %42 : vector<8x64xf32>
    %cst_34 = arith.constant 0.000000e+00 : f32
    %44 = vector.broadcast %cst_34 : f32 to vector<8x64xf32>
    %45 = arith.maximumf %43, %44 : vector<8x64xf32>
    %46 = arith.truncf %45 : vector<8x64xf32> to vector<8x64xbf16>
    %c0_35 = arith.constant 0 : index
    %c0_36 = arith.constant 0 : index
    %47 = vector.load %arg14[%c0_35, %c0_36] : memref<64x32xbf16, #tpu.memory_space<vmem>>, vector<64x32xbf16>
    %cst_37 = arith.constant dense<0.000000e+00> : vector<8x32xf32>
    %48 = tpu.matmul %46, %47, %cst_37 {dimension_numbers = #tpu.dot_dimension_numbers<[1], [0], [0], [1], [0, 0, 1, 1], [], []>} : vector<8x64xbf16>, vector<64x32xbf16>, vector<8x32xf32> -> vector<8x32xf32>
    %c0_38 = arith.constant 0 : index
    %c0_39 = arith.constant 0 : index
    %49 = vector.load %arg15[%c0_38, %c0_39] : memref<1x32xf32, #tpu.memory_space<vmem>>, vector<1x32xf32>
    %50 = vector.broadcast %49 : vector<1x32xf32> to vector<8x32xf32>
    %51 = arith.addf %48, %50 : vector<8x32xf32>
    %cst_40 = arith.constant 0.000000e+00 : f32
    %52 = vector.broadcast %cst_40 : f32 to vector<8x32xf32>
    %53 = arith.maximumf %51, %52 : vector<8x32xf32>
    %54 = arith.truncf %53 : vector<8x32xf32> to vector<8x32xbf16>
    %c0_41 = arith.constant 0 : index
    %c0_42 = arith.constant 0 : index
    %55 = vector.load %arg16[%c0_41, %c0_42] : memref<32x64xbf16, #tpu.memory_space<vmem>>, vector<32x64xbf16>
    %cst_43 = arith.constant dense<0.000000e+00> : vector<8x64xf32>
    %56 = tpu.matmul %54, %55, %cst_43 {dimension_numbers = #tpu.dot_dimension_numbers<[1], [0], [0], [1], [0, 0, 1, 1], [], []>} : vector<8x32xbf16>, vector<32x64xbf16>, vector<8x64xf32> -> vector<8x64xf32>
    %c0_44 = arith.constant 0 : index
    %c0_45 = arith.constant 0 : index
    %57 = vector.load %arg17[%c0_44, %c0_45] : memref<1x64xf32, #tpu.memory_space<vmem>>, vector<1x64xf32>
    %58 = vector.broadcast %57 : vector<1x64xf32> to vector<8x64xf32>
    %59 = arith.addf %56, %58 : vector<8x64xf32>
    %60 = arith.truncf %59 : vector<8x64xf32> to vector<8x64xbf16>
    %c0_46 = arith.constant 0 : index
    %c0_47 = arith.constant 0 : index
    %61 = vector.load %arg18[%c0_46, %c0_47] : memref<64x128xbf16, #tpu.memory_space<vmem>>, vector<64x128xbf16>
    %cst_48 = arith.constant dense<0.000000e+00> : vector<8x128xf32>
    %62 = tpu.matmul %60, %61, %cst_48 {dimension_numbers = #tpu.dot_dimension_numbers<[1], [0], [0], [1], [0, 0, 1, 1], [], []>} : vector<8x64xbf16>, vector<64x128xbf16>, vector<8x128xf32> -> vector<8x128xf32>
    %c0_49 = arith.constant 0 : index
    %c0_50 = arith.constant 0 : index
    %63 = vector.load %arg19[%c0_49, %c0_50] : memref<1x128xf32, #tpu.memory_space<vmem>>, vector<1x128xf32>
    %64 = vector.broadcast %63 : vector<1x128xf32> to vector<8x128xf32>
    %65 = arith.addf %62, %64 : vector<8x128xf32>
    %66 = math.tanh %65 : vector<8x128xf32>
    %cst_51 = arith.constant 1.500000e-01 : f32
    %67 = vector.broadcast %cst_51 : f32 to vector<8x128xf32>
    %68 = arith.mulf %66, %67 : vector<8x128xf32>
    %c0_52 = arith.constant 0 : index
    %c0_53 = arith.constant 0 : index
    %69 = vector.load %arg20[%c0_52, %c0_53] : memref<8x128xf32, #tpu.memory_space<vmem>>, vector<8x128xf32>
    tpu.vector_store %arg20[%c0_52, %c0_53], %68 {strides = array<i32>} : memref<8x128xf32, #tpu.memory_space<vmem>>, vector<8x128xf32>,
    return
  }
  func.func @transform_0(%arg0: i32) -> (i32, i32) {
    %c0_i32 = arith.constant 0 : i32
    %c0_i32_0 = arith.constant 0 : i32
    return %arg0, %c0_i32 : i32, i32
  }
  func.func @transform_1(%arg0: i32) -> (i32, i32) {
    %c0_i32 = arith.constant 0 : i32
    %c0_i32_0 = arith.constant 0 : i32
    %c0_i32_1 = arith.constant 0 : i32
    return %c0_i32, %c0_i32_0 : i32, i32
  }
  func.func @transform_2(%arg0: i32) -> (i32, i32) {
    %c0_i32 = arith.constant 0 : i32
    %c0_i32_0 = arith.constant 0 : i32
    %c0_i32_1 = arith.constant 0 : i32
    return %c0_i32, %c0_i32_0 : i32, i32
  }
  func.func @transform_3(%arg0: i32) -> (i32, i32) {
    %c0_i32 = arith.constant 0 : i32
    %c0_i32_0 = arith.constant 0 : i32
    %c0_i32_1 = arith.constant 0 : i32
    return %c0_i32, %c0_i32_0 : i32, i32
  }
  func.func @transform_4(%arg0: i32) -> (i32, i32) {
    %c0_i32 = arith.constant 0 : i32
    %c0_i32_0 = arith.constant 0 : i32
    %c0_i32_1 = arith.constant 0 : i32
    return %c0_i32, %c0_i32_0 : i32, i32
  }
  func.func @transform_5(%arg0: i32) -> (i32, i32) {
    %c0_i32 = arith.constant 0 : i32
    %c0_i32_0 = arith.constant 0 : i32
    %c0_i32_1 = arith.constant 0 : i32
    return %c0_i32, %c0_i32_0 : i32, i32
  }
  func.func @transform_6(%arg0: i32) -> (i32, i32) {
    %c0_i32 = arith.constant 0 : i32
    %c0_i32_0 = arith.constant 0 : i32
    %c0_i32_1 = arith.constant 0 : i32
    return %c0_i32, %c0_i32_0 : i32, i32
  }
  func.func @transform_7(%arg0: i32) -> (i32, i32) {
    %c0_i32 = arith.constant 0 : i32
    %c0_i32_0 = arith.constant 0 : i32
    %c0_i32_1 = arith.constant 0 : i32
    return %c0_i32, %c0_i32_0 : i32, i32
  }
  func.func @transform_8(%arg0: i32) -> (i32, i32) {
    %c0_i32 = arith.constant 0 : i32
    %c0_i32_0 = arith.constant 0 : i32
    %c0_i32_1 = arith.constant 0 : i32
    return %c0_i32, %c0_i32_0 : i32, i32
  }
  func.func @transform_9(%arg0: i32) -> (i32, i32) {
    %c0_i32 = arith.constant 0 : i32
    %c0_i32_0 = arith.constant 0 : i32
    %c0_i32_1 = arith.constant 0 : i32
    return %c0_i32, %c0_i32_0 : i32, i32
  }
  func.func @transform_10(%arg0: i32) -> (i32, i32) {
    %c0_i32 = arith.constant 0 : i32
    %c0_i32_0 = arith.constant 0 : i32
    %c0_i32_1 = arith.constant 0 : i32
    return %c0_i32, %c0_i32_0 : i32, i32
  }
  func.func @transform_11(%arg0: i32) -> (i32, i32) {
    %c0_i32 = arith.constant 0 : i32
    %c0_i32_0 = arith.constant 0 : i32
    %c0_i32_1 = arith.constant 0 : i32
    return %c0_i32, %c0_i32_0 : i32, i32
  }
  func.func @transform_12(%arg0: i32) -> (i32, i32) {
    %c0_i32 = arith.constant 0 : i32
    %c0_i32_0 = arith.constant 0 : i32
    %c0_i32_1 = arith.constant 0 : i32
    return %c0_i32, %c0_i32_0 : i32, i32
  }
  func.func @transform_13(%arg0: i32) -> (i32, i32) {
    %c0_i32 = arith.constant 0 : i32
    %c0_i32_0 = arith.constant 0 : i32
    %c0_i32_1 = arith.constant 0 : i32
    return %c0_i32, %c0_i32_0 : i32, i32
  }
  func.func @transform_14(%arg0: i32) -> (i32, i32) {
    %c0_i32 = arith.constant 0 : i32
    %c0_i32_0 = arith.constant 0 : i32
    %c0_i32_1 = arith.constant 0 : i32
    return %c0_i32, %c0_i32_0 : i32, i32
  }
  func.func @transform_15(%arg0: i32) -> (i32, i32) {
    %c0_i32 = arith.constant 0 : i32
    %c0_i32_0 = arith.constant 0 : i32
    %c0_i32_1 = arith.constant 0 : i32
    return %c0_i32, %c0_i32_0 : i32, i32
  }
  func.func @transform_16(%arg0: i32) -> (i32, i32) {
    %c0_i32 = arith.constant 0 : i32
    %c0_i32_0 = arith.constant 0 : i32
    %c0_i32_1 = arith.constant 0 : i32
    return %c0_i32, %c0_i32_0 : i32, i32
  }
  func.func @transform_17(%arg0: i32) -> (i32, i32) {
    %c0_i32 = arith.constant 0 : i32
    %c0_i32_0 = arith.constant 0 : i32
    %c0_i32_1 = arith.constant 0 : i32
    return %c0_i32, %c0_i32_0 : i32, i32
  }
  func.func @transform_18(%arg0: i32) -> (i32, i32) {
    %c0_i32 = arith.constant 0 : i32
    %c0_i32_0 = arith.constant 0 : i32
    %c0_i32_1 = arith.constant 0 : i32
    return %c0_i32, %c0_i32_0 : i32, i32
  }
  func.func @transform_19(%arg0: i32) -> (i32, i32) {
    %c0_i32 = arith.constant 0 : i32
    %c0_i32_0 = arith.constant 0 : i32
    return %arg0, %c0_i32 : i32, i32
  }
}

</mosaic_0001>

<llo_original>
// kernel: tpu_custom_call.1
$region0: #{tpu_custom_call.1}
  #allocation0 [shape = 'u32[]', space=smem, size = 0x4, offset = 0x4, fixed_abs, tag = 'smem constant byte address 0x4 - core index']
  #allocation1 [shape = 'u32[144,128]{1,0:T(1,128)}', space=vmem, size = 0x12000, scoped, tag = 'internal scratch']
  %s0 = inlined_call_operand.hbm [shape: bf16[8,128], index: 0, kind: input, shape index: {}]
  %s1 = inlined_call_operand.vmem [shape: bf16[128,128], index: 1, kind: input, shape index: {}]
  %s2 = inlined_call_operand.vmem [shape: f32[1,128], index: 2, kind: input, shape index: {}]
  %s3 = inlined_call_operand.vmem [shape: bf16[128,128], index: 3, kind: input, shape index: {}]
  %s4 = inlined_call_operand.hbm [shape: f32[1,128], index: 4, kind: input, shape index: {}]
  %s5 = inlined_call_operand.vmem [shape: bf16[128,64], index: 5, kind: input, shape index: {}]
  %s6 = inlined_call_operand.hbm [shape: f32[1,64], index: 6, kind: input, shape index: {}]
  %s7 = inlined_call_operand.vmem [shape: bf16[64,128], index: 7, kind: input, shape index: {}]
  %s8 = inlined_call_operand.hbm [shape: f32[1,128], index: 8, kind: input, shape index: {}]
  %s9 = inlined_call_operand.vmem [shape: bf16[128,64], index: 9, kind: input, shape index: {}]
  %s10 = inlined_call_operand.hbm [shape: f32[1,64], index: 10, kind: input, shape index: {}]
  %s11 = inlined_call_operand.vmem [shape: bf16[64,64], index: 11, kind: input, shape index: {}]
  %s12 = inlined_call_operand.hbm [shape: f32[1,64], index: 12, kind: input, shape index: {}]
  %s13 = inlined_call_operand.vmem [shape: bf16[64,32], index: 13, kind: input, shape index: {}]
  %s14 = inlined_call_operand.vmem [shape: f32[1,32], index: 14, kind: input, shape index: {}]
  %s15 = inlined_call_operand.hbm [shape: bf16[32,64], index: 15, kind: input, shape index: {}]
  %s16 = inlined_call_operand.vmem [shape: f32[1,64], index: 16, kind: input, shape index: {}]
  %s17 = inlined_call_operand.vmem [shape: bf16[64,128], index: 17, kind: input, shape index: {}]
  %s18 = inlined_call_operand.vmem [shape: f32[1,128], index: 18, kind: input, shape index: {}]
  %s19 = inlined_call_operand.hbm [shape: f32[8,128], index: 19, kind: output, shape index: {}]
  %s20 = sld [smem:[#allocation0]]
  $region114: #{tpu_custom_call.1} parent=0
    _
  %s22 = ssub.s32 1, %s20
  %s23 = scalar_select 0, %s22, %s20
  $region1: #{tpu_custom_call.1} parent=0
    #allocation2 [shape = 'u8[2048]{0}', space=vmem, size = 0x800, scoped, tag = 'input window, operand 0, single buffered']
    #allocation3 [shape = 's32[1]{0}', space=sflag, size = 0x4, scoped, tag = 'scoped memory for tpu_custom_call.1']
    #allocation4 [shape = 's32[1]{0}', space=sflag, size = 0x4, scoped, tag = 'scoped memory for tpu_custom_call.1']
    #allocation5 [shape = 'u8[512]{0}', space=vmem, size = 0x400, scoped, tag = 'input window, operand 4, single buffered']
    #allocation6 [shape = 's32[1]{0}', space=sflag, size = 0x4, scoped, tag = 'scoped memory for tpu_custom_call.1']
    #allocation7 [shape = 'u8[512]{0}', space=vmem, size = 0x400, scoped, tag = 'input window, operand 6, single buffered']
    #allocation8 [shape = 'u8[512]{0}', space=vmem, size = 0x400, scoped, tag = 'input window, operand 8, single buffered']
    #allocation9 [shape = 's32[1]{0}', space=sflag, size = 0x4, scoped, tag = 'scoped memory for tpu_custom_call.1']
    #allocation10 [shape = 'u8[512]{0}', space=vmem, size = 0x400, scoped, tag = 'input window, operand 10, single buffered']
    #allocation11 [shape = 'u8[512]{0}', space=vmem, size = 0x400, scoped, tag = 'input window, operand 12, single buffered']
    #allocation12 [shape = 's32[1]{0}', space=sflag, size = 0x4, scoped, tag = 'scoped memory for tpu_custom_call.1']
    #allocation13 [shape = 'u8[8192]{0}', space=vmem, size = 0x2000, scoped, tag = 'input window, operand 15, single buffered']
    #allocation14 [shape = 'u8[4096]{0}', space=vmem, size = 0x1000, scoped, tag = 'output window, operand 0, single buffered']
    %24 = vsyncpa [#allocation3], 0
    %25 = vsyncpa [#allocation6], 0
    %26 = vsyncpa [#allocation9], 0
    %27 = vsyncpa [#allocation12], 0
    %28 = vsyncpa [#allocation4], 0
    // Predicated region
    $region2: #{tpu_custom_call.1} parent=1 // pred_check
      _
    $region3: #{tpu_custom_call.1} parent=1 // pred_check_branch
      %30 = sbr.rel (0) target = $region5
    $region4: #{tpu_custom_call.1} parent=1 // pred_region
      %s32 = ssub.s32 64, 64
      %33 = vsyncadd [#allocation3], %s32
      %s35 = sshll.u32 [#allocation2], 4
      %s36 = int_to_ptr.vmem [resolvable:$true] %s35
      %38 = dma.hbm_to_vmem [thread:$0]  %s0, 64, %s36, [#allocation3]
    $region5: #{tpu_custom_call.1} parent=1 // pred_fallthru
      _
    // Predicated region
    $region6: #{tpu_custom_call.1} parent=1 // pred_check
      _
    $region7: #{tpu_custom_call.1} parent=1 // pred_check_branch
      %40 = sbr.rel (0) target = $region9
    $region8: #{tpu_custom_call.1} parent=1 // pred_region
      _
    $region9: #{tpu_custom_call.1} parent=1 // pred_fallthru
      _
    // Predicated region
    $region10: #{tpu_custom_call.1} parent=1 // pred_check
      _
    $region11: #{tpu_custom_call.1} parent=1 // pred_check_branch
      %42 = sbr.rel (0) target = $region13
    $region12: #{tpu_custom_call.1} parent=1 // pred_region
      _
    $region13: #{tpu_custom_call.1} parent=1 // pred_fallthru
      _
    // Predicated region
    $region14: #{tpu_custom_call.1} parent=1 // pred_check
      _
    $region15: #{tpu_custom_call.1} parent=1 // pred_check_branch
      %44 = sbr.rel (0) target = $region17
    $region16: #{tpu_custom_call.1} parent=1 // pred_region
      _
    $region17: #{tpu_custom_call.1} parent=1 // pred_fallthru
      _
    // Predicated region
    $region18: #{tpu_custom_call.1} parent=1 // pred_check
      _
    $region19: #{tpu_custom_call.1} parent=1 // pred_check_branch
      %46 = sbr.rel (0) target = $region21
    $region20: #{tpu_custom_call.1} parent=1 // pred_region
      %s48 = ssub.s32 16, 16
      %49 = vsyncadd [#allocation6], %s48
      %s51 = sshll.u32 [#allocation5], 4
      %s52 = int_to_ptr.vmem [resolvable:$true] %s51
      %54 = dma.hbm_to_vmem [thread:$0]  %s4, 16, %s52, [#allocation6]
    $region21: #{tpu_custom_call.1} parent=1 // pred_fallthru
      _
    // Predicated region
    $region22: #{tpu_custom_call.1} parent=1 // pred_check
      _
    $region23: #{tpu_custom_call.1} parent=1 // pred_check_branch
      %56 = sbr.rel (0) target = $region25
    $region24: #{tpu_custom_call.1} parent=1 // pred_region
      _
    $region25: #{tpu_custom_call.1} parent=1 // pred_fallthru
      _
    // Predicated region
    $region26: #{tpu_custom_call.1} parent=1 // pred_check
      _
    $region27: #{tpu_custom_call.1} parent=1 // pred_check_branch
      %58 = sbr.rel (0) target = $region29
    $region28: #{tpu_custom_call.1} parent=1 // pred_region
      %s60 = ssub.s32 16, 16
      %61 = vsyncadd [#allocation6], %s60
      %s63 = sshll.u32 [#allocation7], 4
      %s64 = int_to_ptr.vmem [resolvable:$true] %s63
      %66 = dma.hbm_to_vmem [thread:$0]  %s6, 16, %s64, [#allocation6]
    $region29: #{tpu_custom_call.1} parent=1 // pred_fallthru
      _
    // Predicated region
    $region30: #{tpu_custom_call.1} parent=1 // pred_check
      _
    $region31: #{tpu_custom_call.1} parent=1 // pred_check_branch
      %68 = sbr.rel (0) target = $region33
    $region32: #{tpu_custom_call.1} parent=1 // pred_region
      _
    $region33: #{tpu_custom_call.1} parent=1 // pred_fallthru
      _
    // Predicated region
    $region34: #{tpu_custom_call.1} parent=1 // pred_check
      _
    $region35: #{tpu_custom_call.1} parent=1 // pred_check_branch
      %70 = sbr.rel (0) target = $region37
    $region36: #{tpu_custom_call.1} parent=1 // pred_region
      %s72 = ssub.s32 16, 16
      %73 = vsyncadd [#allocation9], %s72
      %s75 = sshll.u32 [#allocation8], 4
      %s76 = int_to_ptr.vmem [resolvable:$true] %s75
      %78 = dma.hbm_to_vmem [thread:$0]  %s8, 16, %s76, [#allocation9]
    $region37: #{tpu_custom_call.1} parent=1 // pred_fallthru
      _
    // Predicated region
    $region38: #{tpu_custom_call.1} parent=1 // pred_check
      _
    $region39: #{tpu_custom_call.1} parent=1 // pred_check_branch
      %80 = sbr.rel (0) target = $region41
    $region40: #{tpu_custom_call.1} parent=1 // pred_region
      _
    $region41: #{tpu_custom_call.1} parent=1 // pred_fallthru
      _
    // Predicated region
    $region42: #{tpu_custom_call.1} parent=1 // pred_check
      _
    $region43: #{tpu_custom_call.1} parent=1 // pred_check_branch
      %82 = sbr.rel (0) target = $region45
    $region44: #{tpu_custom_call.1} parent=1 // pred_region
      %s84 = ssub.s32 16, 16
      %85 = vsyncadd [#allocation9], %s84
      %s87 = sshll.u32 [#allocation10], 4
      %s88 = int_to_ptr.vmem [resolvable:$true] %s87
      %90 = dma.hbm_to_vmem [thread:$0]  %s10, 16, %s88, [#allocation9]
    $region45: #{tpu_custom_call.1} parent=1 // pred_fallthru
      _
    // Predicated region
    $region46: #{tpu_custom_call.1} parent=1 // pred_check
      _
    $region47: #{tpu_custom_call.1} parent=1 // pred_check_branch
      %92 = sbr.rel (0) target = $region49
    $region48: #{tpu_custom_call.1} parent=1 // pred_region
      _
    $region49: #{tpu_custom_call.1} parent=1 // pred_fallthru
      _
    // Predicated region
    $region50: #{tpu_custom_call.1} parent=1 // pred_check
      _
    $region51: #{tpu_custom_call.1} parent=1 // pred_check_branch
      %94 = sbr.rel (0) target = $region53
    $region52: #{tpu_custom_call.1} parent=1 // pred_region
      %s96 = ssub.s32 16, 16
      %97 = vsyncadd [#allocation12], %s96
      %s99 = sshll.u32 [#allocation11], 4
      %s100 = int_to_ptr.vmem [resolvable:$true] %s99
      %102 = dma.hbm_to_vmem [thread:$0]  %s12, 16, %s100, [#allocation12]
    $region53: #{tpu_custom_call.1} parent=1 // pred_fallthru
      _
    // Predicated region
    $region54: #{tpu_custom_call.1} parent=1 // pred_check
      _
    $region55: #{tpu_custom_call.1} parent=1 // pred_check_branch
      %104 = sbr.rel (0) target = $region57
    $region56: #{tpu_custom_call.1} parent=1 // pred_region
      _
    $region57: #{tpu_custom_call.1} parent=1 // pred_fallthru
      _
    // Predicated region
    $region58: #{tpu_custom_call.1} parent=1 // pred_check
      _
    $region59: #{tpu_custom_call.1} parent=1 // pred_check_branch
      %106 = sbr.rel (0) target = $region61
    $region60: #{tpu_custom_call.1} parent=1 // pred_region
      _
    $region61: #{tpu_custom_call.1} parent=1 // pred_fallthru
      _
    // Predicated region
    $region62: #{tpu_custom_call.1} parent=1 // pred_check
      _
    $region63: #{tpu_custom_call.1} parent=1 // pred_check_branch
      %108 = sbr.rel (0) target = $region65
    $region64: #{tpu_custom_call.1} parent=1 // pred_region
      %s110 = ssub.s32 256, 256
      %111 = vsyncadd [#allocation12], %s110
      %s112 = sshll.u32 [#allocation13], 4
      %s113 = int_to_ptr.vmem [resolvable:$true] %s112
      %118 = dma.hbm_to_vmem [thread:$0]  %s15, 256, %s113, [#allocation12], 64, 64, 4
    $region65: #{tpu_custom_call.1} parent=1 // pred_fallthru
      _
    // Predicated region
    $region66: #{tpu_custom_call.1} parent=1 // pred_check
      _
    $region67: #{tpu_custom_call.1} parent=1 // pred_check_branch
      %120 = sbr.rel (0) target = $region69
    $region68: #{tpu_custom_call.1} parent=1 // pred_region
      _
    $region69: #{tpu_custom_call.1} parent=1 // pred_fallthru
      _
    // Predicated region
    $region70: #{tpu_custom_call.1} parent=1 // pred_check
      _
    $region71: #{tpu_custom_call.1} parent=1 // pred_check_branch
      %122 = sbr.rel (0) target = $region73
    $region72: #{tpu_custom_call.1} parent=1 // pred_region
      _
    $region73: #{tpu_custom_call.1} parent=1 // pred_fallthru
      _
    // Predicated region
    $region74: #{tpu_custom_call.1} parent=1 // pred_check
      _
    $region75: #{tpu_custom_call.1} parent=1 // pred_check_branch
      %124 = sbr.rel (0) target = $region77
    $region76: #{tpu_custom_call.1} parent=1 // pred_region
      _
    $region77: #{tpu_custom_call.1} parent=1 // pred_fallthru
      _
    // Predicated region
    $region78: #{tpu_custom_call.1} parent=1 // pred_check
      _
    $region79: #{tpu_custom_call.1} parent=1 // pred_check_branch
      %126 = sbr.rel (0) target = $region81
    $region80: #{tpu_custom_call.1} parent=1 // pred_region
      %127 = dma.done [#allocation3], 64
    $region81: #{tpu_custom_call.1} parent=1 // pred_fallthru
      _
    // Predicated region
    $region82: #{tpu_custom_call.1} parent=1 // pred_check
      _
    $region83: #{tpu_custom_call.1} parent=1 // pred_check_branch
      %129 = sbr.rel (0) target = $region85
    $region84: #{tpu_custom_call.1} parent=1 // pred_region
      %130 = dma.done [#allocation6], 16
    $region85: #{tpu_custom_call.1} parent=1 // pred_fallthru
      _
    // Predicated region
    $region86: #{tpu_custom_call.1} parent=1 // pred_check
      _
    $region87: #{tpu_custom_call.1} parent=1 // pred_check_branch
      %132 = sbr.rel (0) target = $region89
    $region88: #{tpu_custom_call.1} parent=1 // pred_region
      %133 = dma.done [#allocation6], 16
    $region89: #{tpu_custom_call.1} parent=1 // pred_fallthru
      _
    // Predicated region
    $region90: #{tpu_custom_call.1} parent=1 // pred_check
      _
    $region91: #{tpu_custom_call.1} parent=1 // pred_check_branch
      %135 = sbr.rel (0) target = $region93
    $region92: #{tpu_custom_call.1} parent=1 // pred_region
      %136 = dma.done [#allocation9], 16
    $region93: #{tpu_custom_call.1} parent=1 // pred_fallthru
      _
    // Predicated region
    $region94: #{tpu_custom_call.1} parent=1 // pred_check
      _
    $region95: #{tpu_custom_call.1} parent=1 // pred_check_branch
      %138 = sbr.rel (0) target = $region97
    $region96: #{tpu_custom_call.1} parent=1 // pred_region
      %139 = dma.done [#allocation9], 16
    $region97: #{tpu_custom_call.1} parent=1 // pred_fallthru
      _
    // Predicated region
    $region98: #{tpu_custom_call.1} parent=1 // pred_check
      _
    $region99: #{tpu_custom_call.1} parent=1 // pred_check_branch
      %141 = sbr.rel (0) target = $region101
    $region100: #{tpu_custom_call.1} parent=1 // pred_region
      %142 = dma.done [#allocation12], 16
    $region101: #{tpu_custom_call.1} parent=1 // pred_fallthru
      _
    // Predicated region
    $region102: #{tpu_custom_call.1} parent=1 // pred_check
      _
    $region103: #{tpu_custom_call.1} parent=1 // pred_check_branch
      %144 = sbr.rel (0) target = $region105
    $region104: #{tpu_custom_call.1} parent=1 // pred_region
      %145 = dma.done [#allocation12], 256
    $region105: #{tpu_custom_call.1} parent=1 // pred_fallthru
      _
    %v147 = vld [vmem:[#allocation2] sm:$0xf]
    %v148 = vld [vmem:[%s1] sm:$0xf]
    %v149 = vld [vmem:[%s1 + $0x4] sm:$0xf]
    %v150 = vld [vmem:[%s1 + $0x8] sm:$0xf]
    %v151 = vld [vmem:[%s1 + $0xc] sm:$0xf]
    %v152 = vld [vmem:[%s1 + $0x10] sm:$0xf]
    %v153 = vld [vmem:[%s1 + $0x14] sm:$0xf]
    %v154 = vld [vmem:[%s1 + $0x18] sm:$0xf]
    %v155 = vld [vmem:[%s1 + $0x1c] sm:$0xf]
    %v156 = vld [vmem:[%s1 + $0x20] sm:$0xf]
    %v157 = vld [vmem:[%s1 + $0x24] sm:$0xf]
    %v158 = vld [vmem:[%s1 + $0x28] sm:$0xf]
    %v159 = vld [vmem:[%s1 + $0x2c] sm:$0xf]
    %v160 = vld [vmem:[%s1 + $0x30] sm:$0xf]
    %v161 = vld [vmem:[%s1 + $0x34] sm:$0xf]
    %v162 = vld [vmem:[%s1 + $0x38] sm:$0xf]
    %v163 = vld [vmem:[%s1 + $0x3c] sm:$0xf]
    %v164 = vld [vmem:[%s2] sm:$0x1]
    %v166 = vlaneseq
    %v167 = vshrl.u32 %v166, 7
    %v168 = vsub.s32 0, %v167
    %v169 = vrot.slane %v164, %v168
    %v187 = vunpack.c.l.b16 %v148
    %v188 = vunpack.c.l.b16 %v149
    %v189 = vunpack.c.l.b16 %v150
    %v190 = vunpack.c.l.b16 %v151
    %v191 = vunpack.c.l.b16 %v152
    %v192 = vunpack.c.l.b16 %v153
    %v193 = vunpack.c.l.b16 %v154
    %v194 = vunpack.c.l.b16 %v155
    %v195 = vunpack.c.l.b16 %v156
    %v196 = vunpack.c.l.b16 %v157
    %v197 = vunpack.c.l.b16 %v158
    %v198 = vunpack.c.l.b16 %v159
    %v199 = vunpack.c.l.b16 %v160
    %v200 = vunpack.c.l.b16 %v161
    %v201 = vunpack.c.l.b16 %v162
    %v202 = vunpack.c.l.b16 %v163
    %v203 = vpack.c.b16 %v188, %v187
    %v204 = vpack.c.b16 %v190, %v189
    %v205 = vpack.c.b16 %v192, %v191
    %v206 = vpack.c.b16 %v194, %v193
    %v207 = vpack.c.b16 %v196, %v195
    %v208 = vpack.c.b16 %v198, %v197
    %v209 = vpack.c.b16 %v200, %v199
    %v210 = vpack.c.b16 %v202, %v201
    %219 = vmatprep.subr.bf16.mxu0 0
    %220 = vmatpush1.bf16.msra.mxu0 %v203
    %221 = vmatprep.subr.bf16.mxu0 0
    %222 = vmatpush1.bf16.msra.mxu0 %v204
    %223 = vmatprep.subr.bf16.mxu0 0
    %224 = vmatpush1.bf16.msra.mxu0 %v205
    %225 = vmatprep.subr.bf16.mxu0 0
    %226 = vmatpush1.bf16.msra.mxu0 %v206
    %227 = vmatprep.subr.bf16.mxu0 0
    %228 = vmatpush1.bf16.msra.mxu0 %v207
    %229 = vmatprep.subr.bf16.mxu0 0
    %230 = vmatpush1.bf16.msra.mxu0 %v208
    %231 = vmatprep.subr.bf16.mxu0 0
    %232 = vmatpush1.bf16.msra.mxu0 %v209
    %233 = vmatprep.subr.bf16.mxu0 0
    %234 = vmatpush1.bf16.msra.mxu0 %v210
    %235 = vmatprep.subr.bf16.mxu0 0
    %236 = vmatpush1.bf16.msra.mxu0 0
    %237 = vmatprep.subr.bf16.mxu0 0
    %238 = vmatpush1.bf16.msra.mxu0 0
    %239 = vmatprep.subr.bf16.mxu0 0
    %240 = vmatpush1.bf16.msra.mxu0 0
    %241 = vmatprep.subr.bf16.mxu0 0
    %242 = vmatpush1.bf16.msra.mxu0 0
    %243 = vmatprep.subr.bf16.mxu0 0
    %244 = vmatpush1.bf16.msra.mxu0 0
    %245 = vmatprep.subr.bf16.mxu0 0
    %246 = vmatpush1.bf16.msra.mxu0 0
    %247 = vmatprep.subr.bf16.mxu0 0
    %248 = vmatpush1.bf16.msra.mxu0 0
    %249 = vmatprep.subr.bf16.mxu0 0
    %250 = vmatpush1.bf16.msra.mxu0 0
    %251 = vmatprep.mubr.bf16.mxu0 0
    %252 = vmatmul.mubr.bf16.gmra.mrb[0].mxu0 %v147
    %v253 = vpop.f32.mrb[0].mxu0
    %v254 = vadd.f32 %v169, %v253
    %v255 = vpop.f32.mrb[0].mxu0
    %v256 = vpop.f32.mrb[0].mxu0
    %v257 = vpop.f32.mrb[0].mxu0
    %258 = vdwg.mxu0
    %v259 = vmax.f32 %v254, 0.0
    %v260 = vpack.c.bf16 %v259, %v259
    %v261 = vld [vmem:[%s3] sm:$0xf]
    %v262 = vld [vmem:[%s3 + $0x4] sm:$0xf]
    %v263 = vld [vmem:[%s3 + $0x8] sm:$0xf]
    %v264 = vld [vmem:[%s3 + $0xc] sm:$0xf]
    %v265 = vld [vmem:[%s3 + $0x10] sm:$0xf]
    %v266 = vld [vmem:[%s3 + $0x14] sm:$0xf]
    %v267 = vld [vmem:[%s3 + $0x18] sm:$0xf]
    %v268 = vld [vmem:[%s3 + $0x1c] sm:$0xf]
    %v269 = vld [vmem:[%s3 + $0x20] sm:$0xf]
    %v270 = vld [vmem:[%s3 + $0x24] sm:$0xf]
    %v271 = vld [vmem:[%s3 + $0x28] sm:$0xf]
    %v272 = vld [vmem:[%s3 + $0x2c] sm:$0xf]
    %v273 = vld [vmem:[%s3 + $0x30] sm:$0xf]
    %v274 = vld [vmem:[%s3 + $0x34] sm:$0xf]
    %v275 = vld [vmem:[%s3 + $0x38] sm:$0xf]
    %v276 = vld [vmem:[%s3 + $0x3c] sm:$0xf]
    %v277 = vld [vmem:[#allocation5] sm:$0x1]
    %v279 = vlaneseq
    %v280 = vshrl.u32 %v279, 7
    %v281 = vsub.s32 0, %v280
    %v282 = vrot.slane %v277, %v281
    %v300 = vunpack.c.l.b16 %v261
    %v301 = vunpack.c.l.b16 %v262
    %v302 = vunpack.c.l.b16 %v263
    %v303 = vunpack.c.l.b16 %v264
    %v304 = vunpack.c.l.b16 %v265
    %v305 = vunpack.c.l.b16 %v266
    %v306 = vunpack.c.l.b16 %v267
    %v307 = vunpack.c.l.b16 %v268
    %v308 = vunpack.c.l.b16 %v269
    %v309 = vunpack.c.l.b16 %v270
    %v310 = vunpack.c.l.b16 %v271
    %v311 = vunpack.c.l.b16 %v272
    %v312 = vunpack.c.l.b16 %v273
    %v313 = vunpack.c.l.b16 %v274
    %v314 = vunpack.c.l.b16 %v275
    %v315 = vunpack.c.l.b16 %v276
    %v316 = vpack.c.b16 %v301, %v300
    %v317 = vpack.c.b16 %v303, %v302
    %v318 = vpack.c.b16 %v305, %v304
    %v319 = vpack.c.b16 %v307, %v306
    %v320 = vpack.c.b16 %v309, %v308
    %v321 = vpack.c.b16 %v311, %v310
    %v322 = vpack.c.b16 %v313, %v312
    %v323 = vpack.c.b16 %v315, %v314
    %332 = vmatprep.subr.bf16.mxu0 0
    %333 = vmatpush1.bf16.msra.mxu0 %v316
    %334 = vmatprep.subr.bf16.mxu0 0
    %335 = vmatpush1.bf16.msra.mxu0 %v317
    %336 = vmatprep.subr.bf16.mxu0 0
    %337 = vmatpush1.bf16.msra.mxu0 %v318
    %338 = vmatprep.subr.bf16.mxu0 0
    %339 = vmatpush1.bf16.msra.mxu0 %v319
    %340 = vmatprep.subr.bf16.mxu0 0
    %341 = vmatpush1.bf16.msra.mxu0 %v320
    %342 = vmatprep.subr.bf16.mxu0 0
    %343 = vmatpush1.bf16.msra.mxu0 %v321
    %344 = vmatprep.subr.bf16.mxu0 0
    %345 = vmatpush1.bf16.msra.mxu0 %v322
    %346 = vmatprep.subr.bf16.mxu0 0
    %347 = vmatpush1.bf16.msra.mxu0 %v323
    %348 = vmatprep.subr.bf16.mxu0 0
    %349 = vmatpush1.bf16.msra.mxu0 0
    %350 = vmatprep.subr.bf16.mxu0 0
    %351 = vmatpush1.bf16.msra.mxu0 0
    %352 = vmatprep.subr.bf16.mxu0 0
    %353 = vmatpush1.bf16.msra.mxu0 0
    %354 = vmatprep.subr.bf16.mxu0 0
    %355 = vmatpush1.bf16.msra.mxu0 0
    %356 = vmatprep.subr.bf16.mxu0 0
    %357 = vmatpush1.bf16.msra.mxu0 0
    %358 = vmatprep.subr.bf16.mxu0 0
    %359 = vmatpush1.bf16.msra.mxu0 0
    %360 = vmatprep.subr.bf16.mxu0 0
    %361 = vmatpush1.bf16.msra.mxu0 0
    %362 = vmatprep.subr.bf16.mxu0 0
    %363 = vmatpush1.bf16.msra.mxu0 0
    %364 = vmatprep.mubr.bf16.mxu0 0
    %365 = vmatmul.mubr.bf16.gmra.mrb[0].mxu0 %v260
    %v366 = vpop.f32.mrb[0].mxu0
    %v367 = vadd.f32 %v282, %v366
    %v368 = vpop.f32.mrb[0].mxu0
    %v369 = vpop.f32.mrb[0].mxu0
    %v370 = vpop.f32.mrb[0].mxu0
    %371 = vdwg.mxu0
    %v372 = vmax.f32 %v367, 0.0
    %v373 = vpack.c.bf16 %v372, %v372
    %v374 = vld [vmem:[%s5] sm:$0xf]
    %v375 = vld [vmem:[%s5 + $0x4] sm:$0xf]
    %v376 = vld [vmem:[%s5 + $0x8] sm:$0xf]
    %v377 = vld [vmem:[%s5 + $0xc] sm:$0xf]
    %v378 = vld [vmem:[%s5 + $0x10] sm:$0xf]
    %v379 = vld [vmem:[%s5 + $0x14] sm:$0xf]
    %v380 = vld [vmem:[%s5 + $0x18] sm:$0xf]
    %v381 = vld [vmem:[%s5 + $0x1c] sm:$0xf]
    %v382 = vld [vmem:[%s5 + $0x20] sm:$0xf]
    %v383 = vld [vmem:[%s5 + $0x24] sm:$0xf]
    %v384 = vld [vmem:[%s5 + $0x28] sm:$0xf]
    %v385 = vld [vmem:[%s5 + $0x2c] sm:$0xf]
    %v386 = vld [vmem:[%s5 + $0x30] sm:$0xf]
    %v387 = vld [vmem:[%s5 + $0x34] sm:$0xf]
    %v388 = vld [vmem:[%s5 + $0x38] sm:$0xf]
    %v389 = vld [vmem:[%s5 + $0x3c] sm:$0xf]
    %v390 = vld [vmem:[#allocation7] sm:$0x1]
    %v392 = vlaneseq
    %v393 = vshrl.u32 %v392, 7
    %v394 = vsub.s32 0, %v393
    %v395 = vrot.slane %v390, %v394
    %v413 = vunpack.c.l.b16 %v374
    %v414 = vunpack.c.l.b16 %v375
    %v415 = vunpack.c.l.b16 %v376
    %v416 = vunpack.c.l.b16 %v377
    %v417 = vunpack.c.l.b16 %v378
    %v418 = vunpack.c.l.b16 %v379
    %v419 = vunpack.c.l.b16 %v380
    %v420 = vunpack.c.l.b16 %v381
    %v421 = vunpack.c.l.b16 %v382
    %v422 = vunpack.c.l.b16 %v383
    %v423 = vunpack.c.l.b16 %v384
    %v424 = vunpack.c.l.b16 %v385
    %v425 = vunpack.c.l.b16 %v386
    %v426 = vunpack.c.l.b16 %v387
    %v427 = vunpack.c.l.b16 %v388
    %v428 = vunpack.c.l.b16 %v389
    %v429 = vpack.c.b16 %v414, %v413
    %v430 = vpack.c.b16 %v416, %v415
    %v431 = vpack.c.b16 %v418, %v417
    %v432 = vpack.c.b16 %v420, %v419
    %v433 = vpack.c.b16 %v422, %v421
    %v434 = vpack.c.b16 %v424, %v423
    %v435 = vpack.c.b16 %v426, %v425
    %v436 = vpack.c.b16 %v428, %v427
    %445 = vmatprep.subr.bf16.mxu0 0
    %446 = vmatpush1.bf16.msra.mxu0 %v429
    %447 = vmatprep.subr.bf16.mxu0 0
    %448 = vmatpush1.bf16.msra.mxu0 %v430
    %449 = vmatprep.subr.bf16.mxu0 0
    %450 = vmatpush1.bf16.msra.mxu0 %v431
    %451 = vmatprep.subr.bf16.mxu0 0
    %452 = vmatpush1.bf16.msra.mxu0 %v432
    %453 = vmatprep.subr.bf16.mxu0 0
    %454 = vmatpush1.bf16.msra.mxu0 %v433
    %455 = vmatprep.subr.bf16.mxu0 0
    %456 = vmatpush1.bf16.msra.mxu0 %v434
    %457 = vmatprep.subr.bf16.mxu0 0
    %458 = vmatpush1.bf16.msra.mxu0 %v435
    %459 = vmatprep.subr.bf16.mxu0 0
    %460 = vmatpush1.bf16.msra.mxu0 %v436
    %461 = vmatprep.subr.bf16.mxu0 0
    %462 = vmatpush1.bf16.msra.mxu0 0
    %463 = vmatprep.subr.bf16.mxu0 0
    %464 = vmatpush1.bf16.msra.mxu0 0
    %465 = vmatprep.subr.bf16.mxu0 0
    %466 = vmatpush1.bf16.msra.mxu0 0
    %467 = vmatprep.subr.bf16.mxu0 0
    %468 = vmatpush1.bf16.msra.mxu0 0
    %469 = vmatprep.subr.bf16.mxu0 0
    %470 = vmatpush1.bf16.msra.mxu0 0
    %471 = vmatprep.subr.bf16.mxu0 0
    %472 = vmatpush1.bf16.msra.mxu0 0
    %473 = vmatprep.subr.bf16.mxu0 0
    %474 = vmatpush1.bf16.msra.mxu0 0
    %475 = vmatprep.subr.bf16.mxu0 0
    %476 = vmatpush1.bf16.msra.mxu0 0
    %477 = vmatprep.mubr.bf16.mxu0 0
    %478 = vmatmul.mubr.bf16.gmra.mrb[0].mxu0 %v373
    %v479 = vpop.f32.mrb[0].mxu0
    %v480 = vadd.f32 %v395, %v479
    %v481 = vpop.f32.mrb[0].mxu0
    %v482 = vpop.f32.mrb[0].mxu0
    %v483 = vpop.f32.mrb[0].mxu0
    %484 = vdwg.mxu0
    %v485 = vmax.f32 %v480, 0.0
    %v486 = vpack.c.bf16 %v485, %v485
    %v487 = vld [vmem:[%s7] sm:$0xf]
    %v488 = vld [vmem:[%s7 + $0x4] sm:$0xf]
    %v489 = vld [vmem:[%s7 + $0x8] sm:$0xf]
    %v490 = vld [vmem:[%s7 + $0xc] sm:$0xf]
    %v491 = vld [vmem:[%s7 + $0x10] sm:$0xf]
    %v492 = vld [vmem:[%s7 + $0x14] sm:$0xf]
    %v493 = vld [vmem:[%s7 + $0x18] sm:$0xf]
    %v494 = vld [vmem:[%s7 + $0x1c] sm:$0xf]
    %v495 = vld [vmem:[#allocation8] sm:$0x1]
    %v497 = vlaneseq
    %v498 = vshrl.u32 %v497, 7
    %v499 = vsub.s32 0, %v498
    %v500 = vrot.slane %v495, %v499
    %v510 = vunpack.c.l.b16 %v487
    %v511 = vunpack.c.l.b16 %v488
    %v512 = vunpack.c.l.b16 %v489
    %v513 = vunpack.c.l.b16 %v490
    %v514 = vunpack.c.l.b16 %v491
    %v515 = vunpack.c.l.b16 %v492
    %v516 = vunpack.c.l.b16 %v493
    %v517 = vunpack.c.l.b16 %v494
    %v518 = vpack.c.b16 %v511, %v510
    %v519 = vpack.c.b16 %v513, %v512
    %v520 = vpack.c.b16 %v515, %v514
    %v521 = vpack.c.b16 %v517, %v516
    %vm526 = vcmask 523264
    %v528 = vsel %vm526, %v486, 0
    %530 = vmatprep.subr.bf16.mxu0 0
    %531 = vmatpush1.bf16.msra.mxu0 %v518
    %532 = vmatprep.subr.bf16.mxu0 0
    %533 = vmatpush1.bf16.msra.mxu0 %v519
    %534 = vmatprep.subr.bf16.mxu0 0
    %535 = vmatpush1.bf16.msra.mxu0 %v520
    %536 = vmatprep.subr.bf16.mxu0 0
    %537 = vmatpush1.bf16.msra.mxu0 %v521
    %538 = vmatprep.subr.bf16.mxu0 0
    %539 = vmatpush1.bf16.msra.mxu0 0
    %540 = vmatprep.subr.bf16.mxu0 0
    %541 = vmatpush1.bf16.msra.mxu0 0
    %542 = vmatprep.subr.bf16.mxu0 0
    %543 = vmatpush1.bf16.msra.mxu0 0
    %544 = vmatprep.subr.bf16.mxu0 0
    %545 = vmatpush1.bf16.msra.mxu0 0
    %546 = vmatprep.subr.bf16.mxu0 0
    %547 = vmatpush1.bf16.msra.mxu0 0
    %548 = vmatprep.subr.bf16.mxu0 0
    %549 = vmatpush1.bf16.msra.mxu0 0
    %550 = vmatprep.subr.bf16.mxu0 0
    %551 = vmatpush1.bf16.msra.mxu0 0
    %552 = vmatprep.subr.bf16.mxu0 0
    %553 = vmatpush1.bf16.msra.mxu0 0
    %554 = vmatprep.subr.bf16.mxu0 0
    %555 = vmatpush1.bf16.msra.mxu0 0
    %556 = vmatprep.subr.bf16.mxu0 0
    %557 = vmatpush1.bf16.msra.mxu0 0
    %558 = vmatprep.subr.bf16.mxu0 0
    %559 = vmatpush1.bf16.msra.mxu0 0
    %560 = vmatprep.subr.bf16.mxu0 0
    %561 = vmatpush1.bf16.msra.mxu0 0
    %562 = vmatprep.mubr.bf16.mxu0 0
    %563 = vmatmul.mubr.bf16.gmra.mrb[0].mxu0 %v528
    %v564 = vpop.f32.mrb[0].mxu0
    %v565 = vadd.f32 %v500, %v564
    %v566 = vpop.f32.mrb[0].mxu0
    %v567 = vpop.f32.mrb[0].mxu0
    %v568 = vpop.f32.mrb[0].mxu0
    %569 = vdwg.mxu0
    %v570 = vpack.c.bf16 %v565, %v565
    %v571 = vld [vmem:[%s9] sm:$0xf]
    %v572 = vld [vmem:[%s9 + $0x4] sm:$0xf]
    %v573 = vld [vmem:[%s9 + $0x8] sm:$0xf]
    %v574 = vld [vmem:[%s9 + $0xc] sm:$0xf]
    %v575 = vld [vmem:[%s9 + $0x10] sm:$0xf]
    %v576 = vld [vmem:[%s9 + $0x14] sm:$0xf]
    %v577 = vld [vmem:[%s9 + $0x18] sm:$0xf]
    %v578 = vld [vmem:[%s9 + $0x1c] sm:$0xf]
    %v579 = vld [vmem:[%s9 + $0x20] sm:$0xf]
    %v580 = vld [vmem:[%s9 + $0x24] sm:$0xf]
    %v581 = vld [vmem:[%s9 + $0x28] sm:$0xf]
    %v582 = vld [vmem:[%s9 + $0x2c] sm:$0xf]
    %v583 = vld [vmem:[%s9 + $0x30] sm:$0xf]
    %v584 = vld [vmem:[%s9 + $0x34] sm:$0xf]
    %v585 = vld [vmem:[%s9 + $0x38] sm:$0xf]
    %v586 = vld [vmem:[%s9 + $0x3c] sm:$0xf]
    %v587 = vld [vmem:[#allocation10] sm:$0x1]
    %v589 = vlaneseq
    %v590 = vshrl.u32 %v589, 7
    %v591 = vsub.s32 0, %v590
    %v592 = vrot.slane %v587, %v591
    %v610 = vunpack.c.l.b16 %v571
    %v611 = vunpack.c.l.b16 %v572
    %v612 = vunpack.c.l.b16 %v573
    %v613 = vunpack.c.l.b16 %v574
    %v614 = vunpack.c.l.b16 %v575
    %v615 = vunpack.c.l.b16 %v576
    %v616 = vunpack.c.l.b16 %v577
    %v617 = vunpack.c.l.b16 %v578
    %v618 = vunpack.c.l.b16 %v579
    %v619 = vunpack.c.l.b16 %v580
    %v620 = vunpack.c.l.b16 %v581
    %v621 = vunpack.c.l.b16 %v582
    %v622 = vunpack.c.l.b16 %v583
    %v623 = vunpack.c.l.b16 %v584
    %v624 = vunpack.c.l.b16 %v585
    %v625 = vunpack.c.l.b16 %v586
    %v626 = vpack.c.b16 %v611, %v610
    %v627 = vpack.c.b16 %v613, %v612
    %v628 = vpack.c.b16 %v615, %v614
    %v629 = vpack.c.b16 %v617, %v616
    %v630 = vpack.c.b16 %v619, %v618
    %v631 = vpack.c.b16 %v621, %v620
    %v632 = vpack.c.b16 %v623, %v622
    %v633 = vpack.c.b16 %v625, %v624
    %642 = vmatprep.subr.bf16.mxu0 0
    %643 = vmatpush1.bf16.msra.mxu0 %v626
    %644 = vmatprep.subr.bf16.mxu0 0
    %645 = vmatpush1.bf16.msra.mxu0 %v627
    %646 = vmatprep.subr.bf16.mxu0 0
    %647 = vmatpush1.bf16.msra.mxu0 %v628
    %648 = vmatprep.subr.bf16.mxu0 0
    %649 = vmatpush1.bf16.msra.mxu0 %v629
    %650 = vmatprep.subr.bf16.mxu0 0
    %651 = vmatpush1.bf16.msra.mxu0 %v630
    %652 = vmatprep.subr.bf16.mxu0 0
    %653 = vmatpush1.bf16.msra.mxu0 %v631
    %654 = vmatprep.subr.bf16.mxu0 0
    %655 = vmatpush1.bf16.msra.mxu0 %v632
    %656 = vmatprep.subr.bf16.mxu0 0
    %657 = vmatpush1.bf16.msra.mxu0 %v633
    %658 = vmatprep.subr.bf16.mxu0 0
    %659 = vmatpush1.bf16.msra.mxu0 0
    %660 = vmatprep.subr.bf16.mxu0 0
    %661 = vmatpush1.bf16.msra.mxu0 0
    %662 = vmatprep.subr.bf16.mxu0 0
    %663 = vmatpush1.bf16.msra.mxu0 0
    %664 = vmatprep.subr.bf16.mxu0 0
    %665 = vmatpush1.bf16.msra.mxu0 0
    %666 = vmatprep.subr.bf16.mxu0 0
    %667 = vmatpush1.bf16.msra.mxu0 0
    %668 = vmatprep.subr.bf16.mxu0 0
    %669 = vmatpush1.bf16.msra.mxu0 0
    %670 = vmatprep.subr.bf16.mxu0 0
    %671 = vmatpush1.bf16.msra.mxu0 0
    %672 = vmatprep.subr.bf16.mxu0 0
    %673 = vmatpush1.bf16.msra.mxu0 0
    %674 = vmatprep.mubr.bf16.mxu0 0
    %675 = vmatmul.mubr.bf16.gmra.mrb[0].mxu0 %v570
    %v676 = vpop.f32.mrb[0].mxu0
    %v677 = vadd.f32 %v592, %v676
    %v678 = vpop.f32.mrb[0].mxu0
    %v679 = vpop.f32.mrb[0].mxu0
    %v680 = vpop.f32.mrb[0].mxu0
    %681 = vdwg.mxu0
    %v682 = vmax.f32 %v677, 0.0
    %v683 = vpack.c.bf16 %v682, %v682
    %v684 = vld [vmem:[%s11] sm:$0xf]
    %v685 = vld [vmem:[%s11 + $0x4] sm:$0xf]
    %v686 = vld [vmem:[%s11 + $0x8] sm:$0xf]
    %v687 = vld [vmem:[%s11 + $0xc] sm:$0xf]
    %v688 = vld [vmem:[%s11 + $0x10] sm:$0xf]
    %v689 = vld [vmem:[%s11 + $0x14] sm:$0xf]
    %v690 = vld [vmem:[%s11 + $0x18] sm:$0xf]
    %v691 = vld [vmem:[%s11 + $0x1c] sm:$0xf]
    %v692 = vld [vmem:[#allocation11] sm:$0x1]
    %v694 = vlaneseq
    %v695 = vshrl.u32 %v694, 7
    %v696 = vsub.s32 0, %v695
    %v697 = vrot.slane %v692, %v696
    %v707 = vunpack.c.l.b16 %v684
    %v708 = vunpack.c.l.b16 %v685
    %v709 = vunpack.c.l.b16 %v686
    %v710 = vunpack.c.l.b16 %v687
    %v711 = vunpack.c.l.b16 %v688
    %v712 = vunpack.c.l.b16 %v689
    %v713 = vunpack.c.l.b16 %v690
    %v714 = vunpack.c.l.b16 %v691
    %v715 = vpack.c.b16 %v708, %v707
    %v716 = vpack.c.b16 %v710, %v709
    %v717 = vpack.c.b16 %v712, %v711
    %v718 = vpack.c.b16 %v714, %v713
    %v724 = vsel %vm526, %v683, 0
    %726 = vmatprep.subr.bf16.mxu0 0
    %727 = vmatpush1.bf16.msra.mxu0 %v715
    %728 = vmatprep.subr.bf16.mxu0 0
    %729 = vmatpush1.bf16.msra.mxu0 %v716
    %730 = vmatprep.subr.bf16.mxu0 0
    %731 = vmatpush1.bf16.msra.mxu0 %v717
    %732 = vmatprep.subr.bf16.mxu0 0
    %733 = vmatpush1.bf16.msra.mxu0 %v718
    %734 = vmatprep.subr.bf16.mxu0 0
    %735 = vmatpush1.bf16.msra.mxu0 0
    %736 = vmatprep.subr.bf16.mxu0 0
    %737 = vmatpush1.bf16.msra.mxu0 0
    %738 = vmatprep.subr.bf16.mxu0 0
    %739 = vmatpush1.bf16.msra.mxu0 0
    %740 = vmatprep.subr.bf16.mxu0 0
    %741 = vmatpush1.bf16.msra.mxu0 0
    %742 = vmatprep.subr.bf16.mxu0 0
    %743 = vmatpush1.bf16.msra.mxu0 0
    %744 = vmatprep.subr.bf16.mxu0 0
    %745 = vmatpush1.bf16.msra.mxu0 0
    %746 = vmatprep.subr.bf16.mxu0 0
    %747 = vmatpush1.bf16.msra.mxu0 0
    %748 = vmatprep.subr.bf16.mxu0 0
    %749 = vmatpush1.bf16.msra.mxu0 0
    %750 = vmatprep.subr.bf16.mxu0 0
    %751 = vmatpush1.bf16.msra.mxu0 0
    %752 = vmatprep.subr.bf16.mxu0 0
    %753 = vmatpush1.bf16.msra.mxu0 0
    %754 = vmatprep.subr.bf16.mxu0 0
    %755 = vmatpush1.bf16.msra.mxu0 0
    %756 = vmatprep.subr.bf16.mxu0 0
    %757 = vmatpush1.bf16.msra.mxu0 0
    %758 = vmatprep.mubr.bf16.mxu0 0
    %759 = vmatmul.mubr.bf16.gmra.mrb[0].mxu0 %v724
    %v760 = vpop.f32.mrb[0].mxu0
    %v761 = vadd.f32 %v697, %v760
    %v762 = vpop.f32.mrb[0].mxu0
    %v763 = vpop.f32.mrb[0].mxu0
    %v764 = vpop.f32.mrb[0].mxu0
    %765 = vdwg.mxu0
    %v766 = vmax.f32 %v761, 0.0
    %v767 = vpack.c.bf16 %v766, %v766
    %v768 = vld [vmem:[%s13] sm:$0xf]
    %v769 = vld [vmem:[%s13 + $0x4] sm:$0xf]
    %v770 = vld [vmem:[%s13 + $0x8] sm:$0xf]
    %v771 = vld [vmem:[%s13 + $0xc] sm:$0xf]
    %v772 = vld [vmem:[%s13 + $0x10] sm:$0xf]
    %v773 = vld [vmem:[%s13 + $0x14] sm:$0xf]
    %v774 = vld [vmem:[%s13 + $0x18] sm:$0xf]
    %v775 = vld [vmem:[%s13 + $0x1c] sm:$0xf]
    %v776 = vld [vmem:[%s14] sm:$0x1]
    %v778 = vlaneseq
    %v779 = vshrl.u32 %v778, 7
    %v780 = vsub.s32 0, %v779
    %v781 = vrot.slane %v776, %v780
    %v791 = vunpack.c.l.b16 %v768
    %v792 = vunpack.c.l.b16 %v769
    %v793 = vunpack.c.l.b16 %v770
    %v794 = vunpack.c.l.b16 %v771
    %v795 = vunpack.c.l.b16 %v772
    %v796 = vunpack.c.l.b16 %v773
    %v797 = vunpack.c.l.b16 %v774
    %v798 = vunpack.c.l.b16 %v775
    %v799 = vpack.c.b16 %v792, %v791
    %v800 = vpack.c.b16 %v794, %v793
    %v801 = vpack.c.b16 %v796, %v795
    %v802 = vpack.c.b16 %v798, %v797
    %v808 = vsel %vm526, %v767, 0
    %810 = vmatprep.subr.bf16.mxu0 0
    %811 = vmatpush1.bf16.msra.mxu0 %v799
    %812 = vmatprep.subr.bf16.mxu0 0
    %813 = vmatpush1.bf16.msra.mxu0 %v800
    %814 = vmatprep.subr.bf16.mxu0 0
    %815 = vmatpush1.bf16.msra.mxu0 %v801
    %816 = vmatprep.subr.bf16.mxu0 0
    %817 = vmatpush1.bf16.msra.mxu0 %v802
    %818 = vmatprep.subr.bf16.mxu0 0
    %819 = vmatpush1.bf16.msra.mxu0 0
    %820 = vmatprep.subr.bf16.mxu0 0
    %821 = vmatpush1.bf16.msra.mxu0 0
    %822 = vmatprep.subr.bf16.mxu0 0
    %823 = vmatpush1.bf16.msra.mxu0 0
    %824 = vmatprep.subr.bf16.mxu0 0
    %825 = vmatpush1.bf16.msra.mxu0 0
    %826 = vmatprep.subr.bf16.mxu0 0
    %827 = vmatpush1.bf16.msra.mxu0 0
    %828 = vmatprep.subr.bf16.mxu0 0
    %829 = vmatpush1.bf16.msra.mxu0 0
    %830 = vmatprep.subr.bf16.mxu0 0
    %831 = vmatpush1.bf16.msra.mxu0 0
    %832 = vmatprep.subr.bf16.mxu0 0
    %833 = vmatpush1.bf16.msra.mxu0 0
    %834 = vmatprep.subr.bf16.mxu0 0
    %835 = vmatpush1.bf16.msra.mxu0 0
    %836 = vmatprep.subr.bf16.mxu0 0
    %837 = vmatpush1.bf16.msra.mxu0 0
    %838 = vmatprep.subr.bf16.mxu0 0
    %839 = vmatpush1.bf16.msra.mxu0 0
    %840 = vmatprep.subr.bf16.mxu0 0
    %841 = vmatpush1.bf16.msra.mxu0 0
    %842 = vmatprep.mubr.bf16.mxu0 0
    %843 = vmatmul.mubr.bf16.gmra.mrb[0].mxu0 %v808
    %v844 = vpop.f32.mrb[0].mxu0
    %v845 = vadd.f32 %v781, %v844
    %v846 = vpop.f32.mrb[0].mxu0
    %v847 = vpop.f32.mrb[0].mxu0
    %v848 = vpop.f32.mrb[0].mxu0
    %849 = vdwg.mxu0
    %v850 = vmax.f32 %v845, 0.0
    %v851 = vpack.c.bf16 %v850, %v850
    %v852 = vld [vmem:[#allocation13] sm:$0xf]
    %v853 = vld [vmem:[#allocation13 + $0x4] sm:$0xf]
    %v854 = vld [vmem:[#allocation13 + $0x8] sm:$0xf]
    %v855 = vld [vmem:[#allocation13 + $0xc] sm:$0xf]
    %v856 = vld [vmem:[%s16] sm:$0x1]
    %v858 = vlaneseq
    %v859 = vshrl.u32 %v858, 7
    %v860 = vsub.s32 0, %v859
    %v861 = vrot.slane %v856, %v860
    %v867 = vunpack.c.l.b16 %v852
    %v868 = vunpack.c.l.b16 %v853
    %v869 = vunpack.c.l.b16 %v854
    %v870 = vunpack.c.l.b16 %v855
    %v871 = vpack.c.b16 %v868, %v867
    %v872 = vpack.c.b16 %v870, %v869
    %vm875 = vcmask 261120
    %v877 = vsel %vm875, %v851, 0
    %879 = vmatprep.subr.bf16.mxu0 0
    %880 = vmatpush1.bf16.msra.mxu0 %v871
    %881 = vmatprep.subr.bf16.mxu0 0
    %882 = vmatpush1.bf16.msra.mxu0 %v872
    %883 = vmatprep.subr.bf16.mxu0 0
    %884 = vmatpush1.bf16.msra.mxu0 0
    %885 = vmatprep.subr.bf16.mxu0 0
    %886 = vmatpush1.bf16.msra.mxu0 0
    %887 = vmatprep.subr.bf16.mxu0 0
    %888 = vmatpush1.bf16.msra.mxu0 0
    %889 = vmatprep.subr.bf16.mxu0 0
    %890 = vmatpush1.bf16.msra.mxu0 0
    %891 = vmatprep.subr.bf16.mxu0 0
    %892 = vmatpush1.bf16.msra.mxu0 0
    %893 = vmatprep.subr.bf16.mxu0 0
    %894 = vmatpush1.bf16.msra.mxu0 0
    %895 = vmatprep.subr.bf16.mxu0 0
    %896 = vmatpush1.bf16.msra.mxu0 0
    %897 = vmatprep.subr.bf16.mxu0 0
    %898 = vmatpush1.bf16.msra.mxu0 0
    %899 = vmatprep.subr.bf16.mxu0 0
    %900 = vmatpush1.bf16.msra.mxu0 0
    %901 = vmatprep.subr.bf16.mxu0 0
    %902 = vmatpush1.bf16.msra.mxu0 0
    %903 = vmatprep.subr.bf16.mxu0 0
    %904 = vmatpush1.bf16.msra.mxu0 0
    %905 = vmatprep.subr.bf16.mxu0 0
    %906 = vmatpush1.bf16.msra.mxu0 0
    %907 = vmatprep.subr.bf16.mxu0 0
    %908 = vmatpush1.bf16.msra.mxu0 0
    %909 = vmatprep.subr.bf16.mxu0 0
    %910 = vmatpush1.bf16.msra.mxu0 0
    %911 = vmatprep.mubr.bf16.mxu0 0
    %912 = vmatmul.mubr.bf16.gmra.mrb[0].mxu0 %v877
    %v913 = vpop.f32.mrb[0].mxu0
    %v914 = vadd.f32 %v861, %v913
    %v915 = vpop.f32.mrb[0].mxu0
    %v916 = vpop.f32.mrb[0].mxu0
    %v917 = vpop.f32.mrb[0].mxu0
    %918 = vdwg.mxu0
    %v919 = vpack.c.bf16 %v914, %v914
    %v920 = vld [vmem:[%s17] sm:$0xf]
    %v921 = vld [vmem:[%s17 + $0x4] sm:$0xf]
    %v922 = vld [vmem:[%s17 + $0x8] sm:$0xf]
    %v923 = vld [vmem:[%s17 + $0xc] sm:$0xf]
    %v924 = vld [vmem:[%s17 + $0x10] sm:$0xf]
    %v925 = vld [vmem:[%s17 + $0x14] sm:$0xf]
    %v926 = vld [vmem:[%s17 + $0x18] sm:$0xf]
    %v927 = vld [vmem:[%s17 + $0x1c] sm:$0xf]
    %v928 = vld [vmem:[%s18] sm:$0x1]
    %v930 = vlaneseq
    %v931 = vshrl.u32 %v930, 7
    %v932 = vsub.s32 0, %v931
    %v933 = vrot.slane %v928, %v932
    %v943 = vunpack.c.l.b16 %v920
    %v944 = vunpack.c.l.b16 %v921
    %v945 = vunpack.c.l.b16 %v922
    %v946 = vunpack.c.l.b16 %v923
    %v947 = vunpack.c.l.b16 %v924
    %v948 = vunpack.c.l.b16 %v925
    %v949 = vunpack.c.l.b16 %v926
    %v950 = vunpack.c.l.b16 %v927
    %v951 = vpack.c.b16 %v944, %v943
    %v952 = vpack.c.b16 %v946, %v945
    %v953 = vpack.c.b16 %v948, %v947
    %v954 = vpack.c.b16 %v950, %v949
    %v960 = vsel %vm526, %v919, 0
    %962 = vmatprep.subr.bf16.mxu0 0
    %963 = vmatpush1.bf16.msra.mxu0 %v951
    %964 = vmatprep.subr.bf16.mxu0 0
    %965 = vmatpush1.bf16.msra.mxu0 %v952
    %966 = vmatprep.subr.bf16.mxu0 0
    %967 = vmatpush1.bf16.msra.mxu0 %v953
    %968 = vmatprep.subr.bf16.mxu0 0
    %969 = vmatpush1.bf16.msra.mxu0 %v954
    %970 = vmatprep.subr.bf16.mxu0 0
    %971 = vmatpush1.bf16.msra.mxu0 0
    %972 = vmatprep.subr.bf16.mxu0 0
    %973 = vmatpush1.bf16.msra.mxu0 0
    %974 = vmatprep.subr.bf16.mxu0 0
    %975 = vmatpush1.bf16.msra.mxu0 0
    %976 = vmatprep.subr.bf16.mxu0 0
    %977 = vmatpush1.bf16.msra.mxu0 0
    %978 = vmatprep.subr.bf16.mxu0 0
    %979 = vmatpush1.bf16.msra.mxu0 0
    %980 = vmatprep.subr.bf16.mxu0 0
    %981 = vmatpush1.bf16.msra.mxu0 0
    %982 = vmatprep.subr.bf16.mxu0 0
    %983 = vmatpush1.bf16.msra.mxu0 0
    %984 = vmatprep.subr.bf16.mxu0 0
    %985 = vmatpush1.bf16.msra.mxu0 0
    %986 = vmatprep.subr.bf16.mxu0 0
    %987 = vmatpush1.bf16.msra.mxu0 0
    %988 = vmatprep.subr.bf16.mxu0 0
    %989 = vmatpush1.bf16.msra.mxu0 0
    %990 = vmatprep.subr.bf16.mxu0 0
    %991 = vmatpush1.bf16.msra.mxu0 0
    %992 = vmatprep.subr.bf16.mxu0 0
    %993 = vmatpush1.bf16.msra.mxu0 0
    %994 = vmatprep.mubr.bf16.mxu0 0
    %995 = vmatmul.mubr.bf16.gmra.mrb[0].mxu0 %v960
    %v996 = vpop.f32.mrb[0].mxu0
    %v997 = vadd.f32 %v933, %v996
    %v998 = vpop.f32.mrb[0].mxu0
    %v999 = vpop.f32.mrb[0].mxu0
    %v1000 = vpop.f32.mrb[0].mxu0
    %1001 = vdwg.mxu0
    %v1002 = vtanh.pop %v997
    %v1003 = vmul.f32 %v1002, 0.15
    %1004 = vst [vmem:[#allocation14] sm:$0xff] %v1003
    // Predicated region
    $region106: #{tpu_custom_call.1} parent=1 // pred_check
      _
    $region107: #{tpu_custom_call.1} parent=1 // pred_check_branch
      %1006 = sbr.rel (0) target = $region109
    $region108: #{tpu_custom_call.1} parent=1 // pred_region
      %s1008 = ssub.s32 128, 128
      %1009 = vsyncadd [#allocation4], %s1008
      %s1011 = sshll.u32 [#allocation14], 4
      %s1012 = int_to_ptr.vmem [resolvable:$true] %s1011
      %1014 = dma.vmem_to_hbm [thread:$0]  %s1012, 128, %s19, [#allocation4]
    $region109: #{tpu_custom_call.1} parent=1 // pred_fallthru
      _
    // Predicated region
    $region110: #{tpu_custom_call.1} parent=1 // pred_check
      _
    $region111: #{tpu_custom_call.1} parent=1 // pred_check_branch
      %1016 = sbr.rel (0) target = $region113
    $region112: #{tpu_custom_call.1} parent=1 // pred_region
      %1017 = dma.done [#allocation4], 128
    $region113: #{tpu_custom_call.1} parent=1 // pred_fallthru
      _
    %1018 = vsyncpa [#allocation3], 1
    %1019 = vsyncpa [#allocation6], 1
    %1020 = vsyncpa [#allocation9], 1
    %1021 = vsyncpa [#allocation12], 1
    %1022 = vsyncpa [#allocation4], 1

// kernel: tpu_custom_call.1
$region0: #{tpu_custom_call.1}
  #allocation0 [shape = 'u32[]', space=smem, size = 0x4, offset = 0x4, fixed_abs, tag = 'smem constant byte address 0x4 - core index']
  #allocation1 [shape = 'u32[144,128]{1,0:T(1,128)}', space=vmem, size = 0x12000, scoped, tag = 'internal scratch']
  %s0 = inlined_call_operand.hbm [shape: bf16[8,128], index: 0, kind: input, shape index: {}]
  %s1 = inlined_call_operand.vmem [shape: bf16[128,128], index: 1, kind: input, shape index: {}]
  %s2 = inlined_call_operand.vmem [shape: f32[1,128], index: 2, kind: input, shape index: {}]
  %s3 = inlined_call_operand.vmem [shape: bf16[128,128], index: 3, kind: input, shape index: {}]
  %s4 = inlined_call_operand.hbm [shape: f32[1,128], index: 4, kind: input, shape index: {}]
  %s5 = inlined_call_operand.vmem [shape: bf16[128,64], index: 5, kind: input, shape index: {}]
  %s6 = inlined_call_operand.hbm [shape: f32[1,64], index: 6, kind: input, shape index: {}]
  %s7 = inlined_call_operand.vmem [shape: bf16[64,128], index: 7, kind: input, shape index: {}]
  %s8 = inlined_call_operand.hbm [shape: f32[1,128], index: 8, kind: input, shape index: {}]
  %s9 = inlined_call_operand.vmem [shape: bf16[128,64], index: 9, kind: input, shape index: {}]
  %s10 = inlined_call_operand.hbm [shape: f32[1,64], index: 10, kind: input, shape index: {}]
  %s11 = inlined_call_operand.vmem [shape: bf16[64,64], index: 11, kind: input, shape index: {}]
  %s12 = inlined_call_operand.hbm [shape: f32[1,64], index: 12, kind: input, shape index: {}]
  %s13 = inlined_call_operand.vmem [shape: bf16[64,32], index: 13, kind: input, shape index: {}]
  %s14 = inlined_call_operand.vmem [shape: f32[1,32], index: 14, kind: input, shape index: {}]
  %s15 = inlined_call_operand.hbm [shape: bf16[32,64], index: 15, kind: input, shape index: {}]
  %s16 = inlined_call_operand.vmem [shape: f32[1,64], index: 16, kind: input, shape index: {}]
  %s17 = inlined_call_operand.vmem [shape: bf16[64,128], index: 17, kind: input, shape index: {}]
  %s18 = inlined_call_operand.vmem [shape: f32[1,128], index: 18, kind: input, shape index: {}]
  %s19 = inlined_call_operand.hbm [shape: f32[8,128], index: 19, kind: output, shape index: {}]
  %s20 = sld [smem:[#allocation0]]
  $region114: #{tpu_custom_call.1} parent=0
    _
  %s22 = ssub.s32 1, %s20
  %s23 = scalar_select 0, %s22, %s20
  $region1: #{tpu_custom_call.1} parent=0
    #allocation2 [shape = 'u8[2048]{0}', space=vmem, size = 0x800, scoped, tag = 'input window, operand 0, single buffered']
    #allocation3 [shape = 's32[1]{0}', space=sflag, size = 0x4, scoped, tag = 'scoped memory for tpu_custom_call.1']
    #allocation4 [shape = 's32[1]{0}', space=sflag, size = 0x4, scoped, tag = 'scoped memory for tpu_custom_call.1']
    #allocation5 [shape = 'u8[512]{0}', space=vmem, size = 0x400, scoped, tag = 'input window, operand 4, single buffered']
    #allocation6 [shape = 's32[1]{0}', space=sflag, size = 0x4, scoped, tag = 'scoped memory for tpu_custom_call.1']
    #allocation7 [shape = 'u8[512]{0}', space=vmem, size = 0x400, scoped, tag = 'input window, operand 6, single buffered']
    #allocation8 [shape = 'u8[512]{0}', space=vmem, size = 0x400, scoped, tag = 'input window, operand 8, single buffered']
    #allocation9 [shape = 's32[1]{0}', space=sflag, size = 0x4, scoped, tag = 'scoped memory for tpu_custom_call.1']
    #allocation10 [shape = 'u8[512]{0}', space=vmem, size = 0x400, scoped, tag = 'input window, operand 10, single buffered']
    #allocation11 [shape = 'u8[512]{0}', space=vmem, size = 0x400, scoped, tag = 'input window, operand 12, single buffered']
    #allocation12 [shape = 's32[1]{0}', space=sflag, size = 0x4, scoped, tag = 'scoped memory for tpu_custom_call.1']
    #allocation13 [shape = 'u8[8192]{0}', space=vmem, size = 0x2000, scoped, tag = 'input window, operand 15, single buffered']
    #allocation14 [shape = 'u8[4096]{0}', space=vmem, size = 0x1000, scoped, tag = 'output window, operand 0, single buffered']
    %24 = vsyncpa [#allocation3], 0
    %25 = vsyncpa [#allocation6], 0
    %26 = vsyncpa [#allocation9], 0
    %27 = vsyncpa [#allocation12], 0
    %28 = vsyncpa [#allocation4], 0
    // Predicated region
    $region2: #{tpu_custom_call.1} parent=1 // pred_check
      _
    $region3: #{tpu_custom_call.1} parent=1 // pred_check_branch
      %30 = sbr.rel (0) target = $region5
    $region4: #{tpu_custom_call.1} parent=1 // pred_region
      %s32 = ssub.s32 64, 64
      %33 = vsyncadd [#allocation3], %s32
      %s35 = sshll.u32 [#allocation2], 4
      %s36 = int_to_ptr.vmem [resolvable:$true] %s35
      %38 = dma.hbm_to_vmem [thread:$0]  %s0, 64, %s36, [#allocation3]
    $region5: #{tpu_custom_call.1} parent=1 // pred_fallthru
      _
    // Predicated region
    $region6: #{tpu_custom_call.1} parent=1 // pred_check
      _
    $region7: #{tpu_custom_call.1} parent=1 // pred_check_branch
      %40 = sbr.rel (0) target = $region9
    $region8: #{tpu_custom_call.1} parent=1 // pred_region
      _
    $region9: #{tpu_custom_call.1} parent=1 // pred_fallthru
      _
    // Predicated region
    $region10: #{tpu_custom_call.1} parent=1 // pred_check
      _
    $region11: #{tpu_custom_call.1} parent=1 // pred_check_branch
      %42 = sbr.rel (0) target = $region13
    $region12: #{tpu_custom_call.1} parent=1 // pred_region
      _
    $region13: #{tpu_custom_call.1} parent=1 // pred_fallthru
      _
    // Predicated region
    $region14: #{tpu_custom_call.1} parent=1 // pred_check
      _
    $region15: #{tpu_custom_call.1} parent=1 // pred_check_branch
      %44 = sbr.rel (0) target = $region17
    $region16: #{tpu_custom_call.1} parent=1 // pred_region
      _
    $region17: #{tpu_custom_call.1} parent=1 // pred_fallthru
      _
    // Predicated region
    $region18: #{tpu_custom_call.1} parent=1 // pred_check
      _
    $region19: #{tpu_custom_call.1} parent=1 // pred_check_branch
      %46 = sbr.rel (0) target = $region21
    $region20: #{tpu_custom_call.1} parent=1 // pred_region
      %s48 = ssub.s32 16, 16
      %49 = vsyncadd [#allocation6], %s48
      %s51 = sshll.u32 [#allocation5], 4
      %s52 = int_to_ptr.vmem [resolvable:$true] %s51
      %54 = dma.hbm_to_vmem [thread:$0]  %s4, 16, %s52, [#allocation6]
    $region21: #{tpu_custom_call.1} parent=1 // pred_fallthru
      _
    // Predicated region
    $region22: #{tpu_custom_call.1} parent=1 // pred_check
      _
    $region23: #{tpu_custom_call.1} parent=1 // pred_check_branch
      %56 = sbr.rel (0) target = $region25
    $region24: #{tpu_custom_call.1} parent=1 // pred_region
      _
    $region25: #{tpu_custom_call.1} parent=1 // pred_fallthru
      _
    // Predicated region
    $region26: #{tpu_custom_call.1} parent=1 // pred_check
      _
    $region27: #{tpu_custom_call.1} parent=1 // pred_check_branch
      %58 = sbr.rel (0) target = $region29
    $region28: #{tpu_custom_call.1} parent=1 // pred_region
      %s60 = ssub.s32 16, 16
      %61 = vsyncadd [#allocation6], %s60
      %s63 = sshll.u32 [#allocation7], 4
      %s64 = int_to_ptr.vmem [resolvable:$true] %s63
      %66 = dma.hbm_to_vmem [thread:$0]  %s6, 16, %s64, [#allocation6]
    $region29: #{tpu_custom_call.1} parent=1 // pred_fallthru
      _
    // Predicated region
    $region30: #{tpu_custom_call.1} parent=1 // pred_check
      _
    $region31: #{tpu_custom_call.1} parent=1 // pred_check_branch
      %68 = sbr.rel (0) target = $region33
    $region32: #{tpu_custom_call.1} parent=1 // pred_region
      _
    $region33: #{tpu_custom_call.1} parent=1 // pred_fallthru
      _
    // Predicated region
    $region34: #{tpu_custom_call.1} parent=1 // pred_check
      _
    $region35: #{tpu_custom_call.1} parent=1 // pred_check_branch
      %70 = sbr.rel (0) target = $region37
    $region36: #{tpu_custom_call.1} parent=1 // pred_region
      %s72 = ssub.s32 16, 16
      %73 = vsyncadd [#allocation9], %s72
      %s75 = sshll.u32 [#allocation8], 4
      %s76 = int_to_ptr.vmem [resolvable:$true] %s75
      %78 = dma.hbm_to_vmem [thread:$0]  %s8, 16, %s76, [#allocation9]
    $region37: #{tpu_custom_call.1} parent=1 // pred_fallthru
      _
    // Predicated region
    $region38: #{tpu_custom_call.1} parent=1 // pred_check
      _
    $region39: #{tpu_custom_call.1} parent=1 // pred_check_branch
      %80 = sbr.rel (0) target = $region41
    $region40: #{tpu_custom_call.1} parent=1 // pred_region
      _
    $region41: #{tpu_custom_call.1} parent=1 // pred_fallthru
      _
    // Predicated region
    $region42: #{tpu_custom_call.1} parent=1 // pred_check
      _
    $region43: #{tpu_custom_call.1} parent=1 // pred_check_branch
      %82 = sbr.rel (0) target = $region45
    $region44: #{tpu_custom_call.1} parent=1 // pred_region
      %s84 = ssub.s32 16, 16
      %85 = vsyncadd [#allocation9], %s84
      %s87 = sshll.u32 [#allocation10], 4
      %s88 = int_to_ptr.vmem [resolvable:$true] %s87
      %90 = dma.hbm_to_vmem [thread:$0]  %s10, 16, %s88, [#allocation9]
    $region45: #{tpu_custom_call.1} parent=1 // pred_fallthru
      _
    // Predicated region
    $region46: #{tpu_custom_call.1} parent=1 // pred_check
      _
    $region47: #{tpu_custom_call.1} parent=1 // pred_check_branch
      %92 = sbr.rel (0) target = $region49
    $region48: #{tpu_custom_call.1} parent=1 // pred_region
      _
    $region49: #{tpu_custom_call.1} parent=1 // pred_fallthru
      _
    // Predicated region
    $region50: #{tpu_custom_call.1} parent=1 // pred_check
      _
    $region51: #{tpu_custom_call.1} parent=1 // pred_check_branch
      %94 = sbr.rel (0) target = $region53
    $region52: #{tpu_custom_call.1} parent=1 // pred_region
      %s96 = ssub.s32 16, 16
      %97 = vsyncadd [#allocation12], %s96
      %s99 = sshll.u32 [#allocation11], 4
      %s100 = int_to_ptr.vmem [resolvable:$true] %s99
      %102 = dma.hbm_to_vmem [thread:$0]  %s12, 16, %s100, [#allocation12]
    $region53: #{tpu_custom_call.1} parent=1 // pred_fallthru
      _
    // Predicated region
    $region54: #{tpu_custom_call.1} parent=1 // pred_check
      _
    $region55: #{tpu_custom_call.1} parent=1 // pred_check_branch
      %104 = sbr.rel (0) target = $region57
    $region56: #{tpu_custom_call.1} parent=1 // pred_region
      _
    $region57: #{tpu_custom_call.1} parent=1 // pred_fallthru
      _
    // Predicated region
    $region58: #{tpu_custom_call.1} parent=1 // pred_check
      _
    $region59: #{tpu_custom_call.1} parent=1 // pred_check_branch
      %106 = sbr.rel (0) target = $region61
    $region60: #{tpu_custom_call.1} parent=1 // pred_region
      _
    $region61: #{tpu_custom_call.1} parent=1 // pred_fallthru
      _
    // Predicated region
    $region62: #{tpu_custom_call.1} parent=1 // pred_check
      _
    $region63: #{tpu_custom_call.1} parent=1 // pred_check_branch
      %108 = sbr.rel (0) target = $region65
    $region64: #{tpu_custom_call.1} parent=1 // pred_region
      %s110 = ssub.s32 256, 256
      %111 = vsyncadd [#allocation12], %s110
      %s112 = sshll.u32 [#allocation13], 4
      %s113 = int_to_ptr.vmem [resolvable:$true] %s112
      %118 = dma.hbm_to_vmem [thread:$0]  %s15, 256, %s113, [#allocation12], 64, 64, 4
    $region65: #{tpu_custom_call.1} parent=1 // pred_fallthru
      _
    // Predicated region
    $region66: #{tpu_custom_call.1} parent=1 // pred_check
      _
    $region67: #{tpu_custom_call.1} parent=1 // pred_check_branch
      %120 = sbr.rel (0) target = $region69
    $region68: #{tpu_custom_call.1} parent=1 // pred_region
      _
    $region69: #{tpu_custom_call.1} parent=1 // pred_fallthru
      _
    // Predicated region
    $region70: #{tpu_custom_call.1} parent=1 // pred_check
      _
    $region71: #{tpu_custom_call.1} parent=1 // pred_check_branch
      %122 = sbr.rel (0) target = $region73
    $region72: #{tpu_custom_call.1} parent=1 // pred_region
      _
    $region73: #{tpu_custom_call.1} parent=1 // pred_fallthru
      _
    // Predicated region
    $region74: #{tpu_custom_call.1} parent=1 // pred_check
      _
    $region75: #{tpu_custom_call.1} parent=1 // pred_check_branch
      %124 = sbr.rel (0) target = $region77
    $region76: #{tpu_custom_call.1} parent=1 // pred_region
      _
    $region77: #{tpu_custom_call.1} parent=1 // pred_fallthru
      _
    // Predicated region
    $region78: #{tpu_custom_call.1} parent=1 // pred_check
      _
    $region79: #{tpu_custom_call.1} parent=1 // pred_check_branch
      %126 = sbr.rel (0) target = $region81
    $region80: #{tpu_custom_call.1} parent=1 // pred_region
      %127 = dma.done [#allocation3], 64
    $region81: #{tpu_custom_call.1} parent=1 // pred_fallthru
      _
    // Predicated region
    $region82: #{tpu_custom_call.1} parent=1 // pred_check
      _
    $region83: #{tpu_custom_call.1} parent=1 // pred_check_branch
      %129 = sbr.rel (0) target = $region85
    $region84: #{tpu_custom_call.1} parent=1 // pred_region
      %130 = dma.done [#allocation6], 16
    $region85: #{tpu_custom_call.1} parent=1 // pred_fallthru
      _
    // Predicated region
    $region86: #{tpu_custom_call.1} parent=1 // pred_check
      _
    $region87: #{tpu_custom_call.1} parent=1 // pred_check_branch
      %132 = sbr.rel (0) target = $region89
    $region88: #{tpu_custom_call.1} parent=1 // pred_region
      %133 = dma.done [#allocation6], 16
    $region89: #{tpu_custom_call.1} parent=1 // pred_fallthru
      _
    // Predicated region
    $region90: #{tpu_custom_call.1} parent=1 // pred_check
      _
    $region91: #{tpu_custom_call.1} parent=1 // pred_check_branch
      %135 = sbr.rel (0) target = $region93
    $region92: #{tpu_custom_call.1} parent=1 // pred_region
      %136 = dma.done [#allocation9], 16
    $region93: #{tpu_custom_call.1} parent=1 // pred_fallthru
      _
    // Predicated region
    $region94: #{tpu_custom_call.1} parent=1 // pred_check
      _
    $region95: #{tpu_custom_call.1} parent=1 // pred_check_branch
      %138 = sbr.rel (0) target = $region97
    $region96: #{tpu_custom_call.1} parent=1 // pred_region
      %139 = dma.done [#allocation9], 16
    $region97: #{tpu_custom_call.1} parent=1 // pred_fallthru
      _
    // Predicated region
    $region98: #{tpu_custom_call.1} parent=1 // pred_check
      _
    $region99: #{tpu_custom_call.1} parent=1 // pred_check_branch
      %141 = sbr.rel (0) target = $region101
    $region100: #{tpu_custom_call.1} parent=1 // pred_region
      %142 = dma.done [#allocation12], 16
    $region101: #{tpu_custom_call.1} parent=1 // pred_fallthru
      _
    // Predicated region
    $region102: #{tpu_custom_call.1} parent=1 // pred_check
      _
    $region103: #{tpu_custom_call.1} parent=1 // pred_check_branch
      %144 = sbr.rel (0) target = $region105
    $region104: #{tpu_custom_call.1} parent=1 // pred_region
      %145 = dma.done [#allocation12], 256
    $region105: #{tpu_custom_call.1} parent=1 // pred_fallthru
      _
    %v147 = vld [vmem:[#allocation2] sm:$0xf]
    %v148 = vld [vmem:[%s1] sm:$0xf]
    %v149 = vld [vmem:[%s1 + $0x4] sm:$0xf]
    %v150 = vld [vmem:[%s1 + $0x8] sm:$0xf]
    %v151 = vld [vmem:[%s1 + $0xc] sm:$0xf]
    %v152 = vld [vmem:[%s1 + $0x10] sm:$0xf]
    %v153 = vld [vmem:[%s1 + $0x14] sm:$0xf]
    %v154 = vld [vmem:[%s1 + $0x18] sm:$0xf]
    %v155 = vld [vmem:[%s1 + $0x1c] sm:$0xf]
    %v156 = vld [vmem:[%s1 + $0x20] sm:$0xf]
    %v157 = vld [vmem:[%s1 + $0x24] sm:$0xf]
    %v158 = vld [vmem:[%s1 + $0x28] sm:$0xf]
    %v159 = vld [vmem:[%s1 + $0x2c] sm:$0xf]
    %v160 = vld [vmem:[%s1 + $0x30] sm:$0xf]
    %v161 = vld [vmem:[%s1 + $0x34] sm:$0xf]
    %v162 = vld [vmem:[%s1 + $0x38] sm:$0xf]
    %v163 = vld [vmem:[%s1 + $0x3c] sm:$0xf]
    %v164 = vld [vmem:[%s2] sm:$0x1]
    %v166 = vlaneseq
    %v167 = vshrl.u32 %v166, 7
    %v168 = vsub.s32 0, %v167
    %v169 = vrot.slane %v164, %v168
    %v187 = vunpack.c.l.b16 %v148
    %v188 = vunpack.c.l.b16 %v149
    %v189 = vunpack.c.l.b16 %v150
    %v190 = vunpack.c.l.b16 %v151
    %v191 = vunpack.c.l.b16 %v152
    %v192 = vunpack.c.l.b16 %v153
    %v193 = vunpack.c.l.b16 %v154
    %v194 = vunpack.c.l.b16 %v155
    %v195 = vunpack.c.l.b16 %v156
    %v196 = vunpack.c.l.b16 %v157
    %v197 = vunpack.c.l.b16 %v158
    %v198 = vunpack.c.l.b16 %v159
    %v199 = vunpack.c.l.b16 %v160
    %v200 = vunpack.c.l.b16 %v161
    %v201 = vunpack.c.l.b16 %v162
    %v202 = vunpack.c.l.b16 %v163
    %v203 = vpack.c.b16 %v188, %v187
    %v204 = vpack.c.b16 %v190, %v189
    %v205 = vpack.c.b16 %v192, %v191
    %v206 = vpack.c.b16 %v194, %v193
    %v207 = vpack.c.b16 %v196, %v195
    %v208 = vpack.c.b16 %v198, %v197
    %v209 = vpack.c.b16 %v200, %v199
    %v210 = vpack.c.b16 %v202, %v201
    %219 = vmatprep.subr.bf16.mxu0 0
    %220 = vmatpush1.bf16.msra.mxu0 %v203
    %221 = vmatprep.subr.bf16.mxu0 0
    %222 = vmatpush1.bf16.msra.mxu0 %v204
    %223 = vmatprep.subr.bf16.mxu0 0
    %224 = vmatpush1.bf16.msra.mxu0 %v205
    %225 = vmatprep.subr.bf16.mxu0 0
    %226 = vmatpush1.bf16.msra.mxu0 %v206
    %227 = vmatprep.subr.bf16.mxu0 0
    %228 = vmatpush1.bf16.msra.mxu0 %v207
    %229 = vmatprep.subr.bf16.mxu0 0
    %230 = vmatpush1.bf16.msra.mxu0 %v208
    %231 = vmatprep.subr.bf16.mxu0 0
    %232 = vmatpush1.bf16.msra.mxu0 %v209
    %233 = vmatprep.subr.bf16.mxu0 0
    %234 = vmatpush1.bf16.msra.mxu0 %v210
    %235 = vmatprep.subr.bf16.mxu0 0
    %236 = vmatpush1.bf16.msra.mxu0 0
    %237 = vmatprep.subr.bf16.mxu0 0
    %238 = vmatpush1.bf16.msra.mxu0 0
    %239 = vmatprep.subr.bf16.mxu0 0
    %240 = vmatpush1.bf16.msra.mxu0 0
    %241 = vmatprep.subr.bf16.mxu0 0
    %242 = vmatpush1.bf16.msra.mxu0 0
    %243 = vmatprep.subr.bf16.mxu0 0
    %244 = vmatpush1.bf16.msra.mxu0 0
    %245 = vmatprep.subr.bf16.mxu0 0
    %246 = vmatpush1.bf16.msra.mxu0 0
    %247 = vmatprep.subr.bf16.mxu0 0
    %248 = vmatpush1.bf16.msra.mxu0 0
    %249 = vmatprep.subr.bf16.mxu0 0
    %250 = vmatpush1.bf16.msra.mxu0 0
    %251 = vmatprep.mubr.bf16.mxu0 0
    %252 = vmatmul.mubr.bf16.gmra.mrb[0].mxu0 %v147
    %v253 = vpop.f32.mrb[0].mxu0
    %v254 = vadd.f32 %v169, %v253
    %v255 = vpop.f32.mrb[0].mxu0
    %v256 = vpop.f32.mrb[0].mxu0
    %v257 = vpop.f32.mrb[0].mxu0
    %258 = vdwg.mxu0
    %v259 = vmax.f32 %v254, 0.0
    %v260 = vpack.c.bf16 %v259, %v259
    %v261 = vld [vmem:[%s3] sm:$0xf]
    %v262 = vld [vmem:[%s3 + $0x4] sm:$0xf]
    %v263 = vld [vmem:[%s3 + $0x8] sm:$0xf]
    %v264 = vld [vmem:[%s3 + $0xc] sm:$0xf]
    %v265 = vld [vmem:[%s3 + $0x10] sm:$0xf]
    %v266 = vld [vmem:[%s3 + $0x14] sm:$0xf]
    %v267 = vld [vmem:[%s3 + $0x18] sm:$0xf]
    %v268 = vld [vmem:[%s3 + $0x1c] sm:$0xf]
    %v269 = vld [vmem:[%s3 + $0x20] sm:$0xf]
    %v270 = vld [vmem:[%s3 + $0x24] sm:$0xf]
    %v271 = vld [vmem:[%s3 + $0x28] sm:$0xf]
    %v272 = vld [vmem:[%s3 + $0x2c] sm:$0xf]
    %v273 = vld [vmem:[%s3 + $0x30] sm:$0xf]
    %v274 = vld [vmem:[%s3 + $0x34] sm:$0xf]
    %v275 = vld [vmem:[%s3 + $0x38] sm:$0xf]
    %v276 = vld [vmem:[%s3 + $0x3c] sm:$0xf]
    %v277 = vld [vmem:[#allocation5] sm:$0x1]
    %v279 = vlaneseq
    %v280 = vshrl.u32 %v279, 7
    %v281 = vsub.s32 0, %v280
    %v282 = vrot.slane %v277, %v281
    %v300 = vunpack.c.l.b16 %v261
    %v301 = vunpack.c.l.b16 %v262
    %v302 = vunpack.c.l.b16 %v263
    %v303 = vunpack.c.l.b16 %v264
    %v304 = vunpack.c.l.b16 %v265
    %v305 = vunpack.c.l.b16 %v266
    %v306 = vunpack.c.l.b16 %v267
    %v307 = vunpack.c.l.b16 %v268
    %v308 = vunpack.c.l.b16 %v269
    %v309 = vunpack.c.l.b16 %v270
    %v310 = vunpack.c.l.b16 %v271
    %v311 = vunpack.c.l.b16 %v272
    %v312 = vunpack.c.l.b16 %v273
    %v313 = vunpack.c.l.b16 %v274
    %v314 = vunpack.c.l.b16 %v275
    %v315 = vunpack.c.l.b16 %v276
    %v316 = vpack.c.b16 %v301, %v300
    %v317 = vpack.c.b16 %v303, %v302
    %v318 = vpack.c.b16 %v305, %v304
    %v319 = vpack.c.b16 %v307, %v306
    %v320 = vpack.c.b16 %v309, %v308
    %v321 = vpack.c.b16 %v311, %v310
    %v322 = vpack.c.b16 %v313, %v312
    %v323 = vpack.c.b16 %v315, %v314
    %332 = vmatprep.subr.bf16.mxu0 0
    %333 = vmatpush1.bf16.msra.mxu0 %v316
    %334 = vmatprep.subr.bf16.mxu0 0
    %335 = vmatpush1.bf16.msra.mxu0 %v317
    %336 = vmatprep.subr.bf16.mxu0 0
    %337 = vmatpush1.bf16.msra.mxu0 %v318
    %338 = vmatprep.subr.bf16.mxu0 0
    %339 = vmatpush1.bf16.msra.mxu0 %v319
    %340 = vmatprep.subr.bf16.mxu0 0
    %341 = vmatpush1.bf16.msra.mxu0 %v320
    %342 = vmatprep.subr.bf16.mxu0 0
    %343 = vmatpush1.bf16.msra.mxu0 %v321
    %344 = vmatprep.subr.bf16.mxu0 0
    %345 = vmatpush1.bf16.msra.mxu0 %v322
    %346 = vmatprep.subr.bf16.mxu0 0
    %347 = vmatpush1.bf16.msra.mxu0 %v323
    %348 = vmatprep.subr.bf16.mxu0 0
    %349 = vmatpush1.bf16.msra.mxu0 0
    %350 = vmatprep.subr.bf16.mxu0 0
    %351 = vmatpush1.bf16.msra.mxu0 0
    %352 = vmatprep.subr.bf16.mxu0 0
    %353 = vmatpush1.bf16.msra.mxu0 0
    %354 = vmatprep.subr.bf16.mxu0 0
    %355 = vmatpush1.bf16.msra.mxu0 0
    %356 = vmatprep.subr.bf16.mxu0 0
    %357 = vmatpush1.bf16.msra.mxu0 0
    %358 = vmatprep.subr.bf16.mxu0 0
    %359 = vmatpush1.bf16.msra.mxu0 0
    %360 = vmatprep.subr.bf16.mxu0 0
    %361 = vmatpush1.bf16.msra.mxu0 0
    %362 = vmatprep.subr.bf16.mxu0 0
    %363 = vmatpush1.bf16.msra.mxu0 0
    %364 = vmatprep.mubr.bf16.mxu0 0
    %365 = vmatmul.mubr.bf16.gmra.mrb[0].mxu0 %v260
    %v366 = vpop.f32.mrb[0].mxu0
    %v367 = vadd.f32 %v282, %v366
    %v368 = vpop.f32.mrb[0].mxu0
    %v369 = vpop.f32.mrb[0].mxu0
    %v370 = vpop.f32.mrb[0].mxu0
    %371 = vdwg.mxu0
    %v372 = vmax.f32 %v367, 0.0
    %v373 = vpack.c.bf16 %v372, %v372
    %v374 = vld [vmem:[%s5] sm:$0xf]
    %v375 = vld [vmem:[%s5 + $0x4] sm:$0xf]
    %v376 = vld [vmem:[%s5 + $0x8] sm:$0xf]
    %v377 = vld [vmem:[%s5 + $0xc] sm:$0xf]
    %v378 = vld [vmem:[%s5 + $0x10] sm:$0xf]
    %v379 = vld [vmem:[%s5 + $0x14] sm:$0xf]
    %v380 = vld [vmem:[%s5 + $0x18] sm:$0xf]
    %v381 = vld [vmem:[%s5 + $0x1c] sm:$0xf]
    %v382 = vld [vmem:[%s5 + $0x20] sm:$0xf]
    %v383 = vld [vmem:[%s5 + $0x24] sm:$0xf]
    %v384 = vld [vmem:[%s5 + $0x28] sm:$0xf]
    %v385 = vld [vmem:[%s5 + $0x2c] sm:$0xf]
    %v386 = vld [vmem:[%s5 + $0x30] sm:$0xf]
    %v387 = vld [vmem:[%s5 + $0x34] sm:$0xf]
    %v388 = vld [vmem:[%s5 + $0x38] sm:$0xf]
    %v389 = vld [vmem:[%s5 + $0x3c] sm:$0xf]
    %v390 = vld [vmem:[#allocation7] sm:$0x1]
    %v392 = vlaneseq
    %v393 = vshrl.u32 %v392, 7
    %v394 = vsub.s32 0, %v393
    %v395 = vrot.slane %v390, %v394
    %v413 = vunpack.c.l.b16 %v374
    %v414 = vunpack.c.l.b16 %v375
    %v415 = vunpack.c.l.b16 %v376
    %v416 = vunpack.c.l.b16 %v377
    %v417 = vunpack.c.l.b16 %v378
    %v418 = vunpack.c.l.b16 %v379
    %v419 = vunpack.c.l.b16 %v380
    %v420 = vunpack.c.l.b16 %v381
    %v421 = vunpack.c.l.b16 %v382
    %v422 = vunpack.c.l.b16 %v383
    %v423 = vunpack.c.l.b16 %v384
    %v424 = vunpack.c.l.b16 %v385
    %v425 = vunpack.c.l.b16 %v386
    %v426 = vunpack.c.l.b16 %v387
    %v427 = vunpack.c.l.b16 %v388
    %v428 = vunpack.c.l.b16 %v389
    %v429 = vpack.c.b16 %v414, %v413
    %v430 = vpack.c.b16 %v416, %v415
    %v431 = vpack.c.b16 %v418, %v417
    %v432 = vpack.c.b16 %v420, %v419
    %v433 = vpack.c.b16 %v422, %v421
    %v434 = vpack.c.b16 %v424, %v423
    %v435 = vpack.c.b16 %v426, %v425
    %v436 = vpack.c.b16 %v428, %v427
    %445 = vmatprep.subr.bf16.mxu0 0
    %446 = vmatpush1.bf16.msra.mxu0 %v429
    %447 = vmatprep.subr.bf16.mxu0 0
    %448 = vmatpush1.bf16.msra.mxu0 %v430
    %449 = vmatprep.subr.bf16.mxu0 0
    %450 = vmatpush1.bf16.msra.mxu0 %v431
    %451 = vmatprep.subr.bf16.mxu0 0
    %452 = vmatpush1.bf16.msra.mxu0 %v432
    %453 = vmatprep.subr.bf16.mxu0 0
    %454 = vmatpush1.bf16.msra.mxu0 %v433
    %455 = vmatprep.subr.bf16.mxu0 0
    %456 = vmatpush1.bf16.msra.mxu0 %v434
    %457 = vmatprep.subr.bf16.mxu0 0
    %458 = vmatpush1.bf16.msra.mxu0 %v435
    %459 = vmatprep.subr.bf16.mxu0 0
    %460 = vmatpush1.bf16.msra.mxu0 %v436
    %461 = vmatprep.subr.bf16.mxu0 0
    %462 = vmatpush1.bf16.msra.mxu0 0
    %463 = vmatprep.subr.bf16.mxu0 0
    %464 = vmatpush1.bf16.msra.mxu0 0
    %465 = vmatprep.subr.bf16.mxu0 0
    %466 = vmatpush1.bf16.msra.mxu0 0
    %467 = vmatprep.subr.bf16.mxu0 0
    %468 = vmatpush1.bf16.msra.mxu0 0
    %469 = vmatprep.subr.bf16.mxu0 0
    %470 = vmatpush1.bf16.msra.mxu0 0
    %471 = vmatprep.subr.bf16.mxu0 0
    %472 = vmatpush1.bf16.msra.mxu0 0
    %473 = vmatprep.subr.bf16.mxu0 0
    %474 = vmatpush1.bf16.msra.mxu0 0
    %475 = vmatprep.subr.bf16.mxu0 0
    %476 = vmatpush1.bf16.msra.mxu0 0
    %477 = vmatprep.mubr.bf16.mxu0 0
    %478 = vmatmul.mubr.bf16.gmra.mrb[0].mxu0 %v373
    %v479 = vpop.f32.mrb[0].mxu0
    %v480 = vadd.f32 %v395, %v479
    %v481 = vpop.f32.mrb[0].mxu0
    %v482 = vpop.f32.mrb[0].mxu0
    %v483 = vpop.f32.mrb[0].mxu0
    %484 = vdwg.mxu0
    %v485 = vmax.f32 %v480, 0.0
    %v486 = vpack.c.bf16 %v485, %v485
    %v487 = vld [vmem:[%s7] sm:$0xf]
    %v488 = vld [vmem:[%s7 + $0x4] sm:$0xf]
    %v489 = vld [vmem:[%s7 + $0x8] sm:$0xf]
    %v490 = vld [vmem:[%s7 + $0xc] sm:$0xf]
    %v491 = vld [vmem:[%s7 + $0x10] sm:$0xf]
    %v492 = vld [vmem:[%s7 + $0x14] sm:$0xf]
    %v493 = vld [vmem:[%s7 + $0x18] sm:$0xf]
    %v494 = vld [vmem:[%s7 + $0x1c] sm:$0xf]
    %v495 = vld [vmem:[#allocation8] sm:$0x1]
    %v497 = vlaneseq
    %v498 = vshrl.u32 %v497, 7
    %v499 = vsub.s32 0, %v498
    %v500 = vrot.slane %v495, %v499
    %v510 = vunpack.c.l.b16 %v487
    %v511 = vunpack.c.l.b16 %v488
    %v512 = vunpack.c.l.b16 %v489
    %v513 = vunpack.c.l.b16 %v490
    %v514 = vunpack.c.l.b16 %v491
    %v515 = vunpack.c.l.b16 %v492
    %v516 = vunpack.c.l.b16 %v493
    %v517 = vunpack.c.l.b16 %v494
    %v518 = vpack.c.b16 %v511, %v510
    %v519 = vpack.c.b16 %v513, %v512
    %v520 = vpack.c.b16 %v515, %v514
    %v521 = vpack.c.b16 %v517, %v516
    %vm526 = vcmask 523264
    %v528 = vsel %vm526, %v486, 0
    %530 = vmatprep.subr.bf16.mxu0 0
    %531 = vmatpush1.bf16.msra.mxu0 %v518
    %532 = vmatprep.subr.bf16.mxu0 0
    %533 = vmatpush1.bf16.msra.mxu0 %v519
    %534 = vmatprep.subr.bf16.mxu0 0
    %535 = vmatpush1.bf16.msra.mxu0 %v520
    %536 = vmatprep.subr.bf16.mxu0 0
    %537 = vmatpush1.bf16.msra.mxu0 %v521
    %538 = vmatprep.subr.bf16.mxu0 0
    %539 = vmatpush1.bf16.msra.mxu0 0
    %540 = vmatprep.subr.bf16.mxu0 0
    %541 = vmatpush1.bf16.msra.mxu0 0
    %542 = vmatprep.subr.bf16.mxu0 0
    %543 = vmatpush1.bf16.msra.mxu0 0
    %544 = vmatprep.subr.bf16.mxu0 0
    %545 = vmatpush1.bf16.msra.mxu0 0
    %546 = vmatprep.subr.bf16.mxu0 0
    %547 = vmatpush1.bf16.msra.mxu0 0
    %548 = vmatprep.subr.bf16.mxu0 0
    %549 = vmatpush1.bf16.msra.mxu0 0
    %550 = vmatprep.subr.bf16.mxu0 0
    %551 = vmatpush1.bf16.msra.mxu0 0
    %552 = vmatprep.subr.bf16.mxu0 0
    %553 = vmatpush1.bf16.msra.mxu0 0
    %554 = vmatprep.subr.bf16.mxu0 0
    %555 = vmatpush1.bf16.msra.mxu0 0
    %556 = vmatprep.subr.bf16.mxu0 0
    %557 = vmatpush1.bf16.msra.mxu0 0
    %558 = vmatprep.subr.bf16.mxu0 0
    %559 = vmatpush1.bf16.msra.mxu0 0
    %560 = vmatprep.subr.bf16.mxu0 0
    %561 = vmatpush1.bf16.msra.mxu0 0
    %562 = vmatprep.mubr.bf16.mxu0 0
    %563 = vmatmul.mubr.bf16.gmra.mrb[0].mxu0 %v528
    %v564 = vpop.f32.mrb[0].mxu0
    %v565 = vadd.f32 %v500, %v564
    %v566 = vpop.f32.mrb[0].mxu0
    %v567 = vpop.f32.mrb[0].mxu0
    %v568 = vpop.f32.mrb[0].mxu0
    %569 = vdwg.mxu0
    %v570 = vpack.c.bf16 %v565, %v565
    %v571 = vld [vmem:[%s9] sm:$0xf]
    %v572 = vld [vmem:[%s9 + $0x4] sm:$0xf]
    %v573 = vld [vmem:[%s9 + $0x8] sm:$0xf]
    %v574 = vld [vmem:[%s9 + $0xc] sm:$0xf]
    %v575 = vld [vmem:[%s9 + $0x10] sm:$0xf]
    %v576 = vld [vmem:[%s9 + $0x14] sm:$0xf]
    %v577 = vld [vmem:[%s9 + $0x18] sm:$0xf]
    %v578 = vld [vmem:[%s9 + $0x1c] sm:$0xf]
    %v579 = vld [vmem:[%s9 + $0x20] sm:$0xf]
    %v580 = vld [vmem:[%s9 + $0x24] sm:$0xf]
    %v581 = vld [vmem:[%s9 + $0x28] sm:$0xf]
    %v582 = vld [vmem:[%s9 + $0x2c] sm:$0xf]
    %v583 = vld [vmem:[%s9 + $0x30] sm:$0xf]
    %v584 = vld [vmem:[%s9 + $0x34] sm:$0xf]
    %v585 = vld [vmem:[%s9 + $0x38] sm:$0xf]
    %v586 = vld [vmem:[%s9 + $0x3c] sm:$0xf]
    %v587 = vld [vmem:[#allocation10] sm:$0x1]
    %v589 = vlaneseq
    %v590 = vshrl.u32 %v589, 7
    %v591 = vsub.s32 0, %v590
    %v592 = vrot.slane %v587, %v591
    %v610 = vunpack.c.l.b16 %v571
    %v611 = vunpack.c.l.b16 %v572
    %v612 = vunpack.c.l.b16 %v573
    %v613 = vunpack.c.l.b16 %v574
    %v614 = vunpack.c.l.b16 %v575
    %v615 = vunpack.c.l.b16 %v576
    %v616 = vunpack.c.l.b16 %v577
    %v617 = vunpack.c.l.b16 %v578
    %v618 = vunpack.c.l.b16 %v579
    %v619 = vunpack.c.l.b16 %v580
    %v620 = vunpack.c.l.b16 %v581
    %v621 = vunpack.c.l.b16 %v582
    %v622 = vunpack.c.l.b16 %v583
    %v623 = vunpack.c.l.b16 %v584
    %v624 = vunpack.c.l.b16 %v585
    %v625 = vunpack.c.l.b16 %v586
    %v626 = vpack.c.b16 %v611, %v610
    %v627 = vpack.c.b16 %v613, %v612
    %v628 = vpack.c.b16 %v615, %v614
    %v629 = vpack.c.b16 %v617, %v616
    %v630 = vpack.c.b16 %v619, %v618
    %v631 = vpack.c.b16 %v621, %v620
    %v632 = vpack.c.b16 %v623, %v622
    %v633 = vpack.c.b16 %v625, %v624
    %642 = vmatprep.subr.bf16.mxu0 0
    %643 = vmatpush1.bf16.msra.mxu0 %v626
    %644 = vmatprep.subr.bf16.mxu0 0
    %645 = vmatpush1.bf16.msra.mxu0 %v627
    %646 = vmatprep.subr.bf16.mxu0 0
    %647 = vmatpush1.bf16.msra.mxu0 %v628
    %648 = vmatprep.subr.bf16.mxu0 0
    %649 = vmatpush1.bf16.msra.mxu0 %v629
    %650 = vmatprep.subr.bf16.mxu0 0
    %651 = vmatpush1.bf16.msra.mxu0 %v630
    %652 = vmatprep.subr.bf16.mxu0 0
    %653 = vmatpush1.bf16.msra.mxu0 %v631
    %654 = vmatprep.subr.bf16.mxu0 0
    %655 = vmatpush1.bf16.msra.mxu0 %v632
    %656 = vmatprep.subr.bf16.mxu0 0
    %657 = vmatpush1.bf16.msra.mxu0 %v633
    %658 = vmatprep.subr.bf16.mxu0 0
    %659 = vmatpush1.bf16.msra.mxu0 0
    %660 = vmatprep.subr.bf16.mxu0 0
    %661 = vmatpush1.bf16.msra.mxu0 0
    %662 = vmatprep.subr.bf16.mxu0 0
    %663 = vmatpush1.bf16.msra.mxu0 0
    %664 = vmatprep.subr.bf16.mxu0 0
    %665 = vmatpush1.bf16.msra.mxu0 0
    %666 = vmatprep.subr.bf16.mxu0 0
    %667 = vmatpush1.bf16.msra.mxu0 0
    %668 = vmatprep.subr.bf16.mxu0 0
    %669 = vmatpush1.bf16.msra.mxu0 0
    %670 = vmatprep.subr.bf16.mxu0 0
    %671 = vmatpush1.bf16.msra.mxu0 0
    %672 = vmatprep.subr.bf16.mxu0 0
    %673 = vmatpush1.bf16.msra.mxu0 0
    %674 = vmatprep.mubr.bf16.mxu0 0
    %675 = vmatmul.mubr.bf16.gmra.mrb[0].mxu0 %v570
    %v676 = vpop.f32.mrb[0].mxu0
    %v677 = vadd.f32 %v592, %v676
    %v678 = vpop.f32.mrb[0].mxu0
    %v679 = vpop.f32.mrb[0].mxu0
    %v680 = vpop.f32.mrb[0].mxu0
    %681 = vdwg.mxu0
    %v682 = vmax.f32 %v677, 0.0
    %v683 = vpack.c.bf16 %v682, %v682
    %v684 = vld [vmem:[%s11] sm:$0xf]
    %v685 = vld [vmem:[%s11 + $0x4] sm:$0xf]
    %v686 = vld [vmem:[%s11 + $0x8] sm:$0xf]
    %v687 = vld [vmem:[%s11 + $0xc] sm:$0xf]
    %v688 = vld [vmem:[%s11 + $0x10] sm:$0xf]
    %v689 = vld [vmem:[%s11 + $0x14] sm:$0xf]
    %v690 = vld [vmem:[%s11 + $0x18] sm:$0xf]
    %v691 = vld [vmem:[%s11 + $0x1c] sm:$0xf]
    %v692 = vld [vmem:[#allocation11] sm:$0x1]
    %v694 = vlaneseq
    %v695 = vshrl.u32 %v694, 7
    %v696 = vsub.s32 0, %v695
    %v697 = vrot.slane %v692, %v696
    %v707 = vunpack.c.l.b16 %v684
    %v708 = vunpack.c.l.b16 %v685
    %v709 = vunpack.c.l.b16 %v686
    %v710 = vunpack.c.l.b16 %v687
    %v711 = vunpack.c.l.b16 %v688
    %v712 = vunpack.c.l.b16 %v689
    %v713 = vunpack.c.l.b16 %v690
    %v714 = vunpack.c.l.b16 %v691
    %v715 = vpack.c.b16 %v708, %v707
    %v716 = vpack.c.b16 %v710, %v709
    %v717 = vpack.c.b16 %v712, %v711
    %v718 = vpack.c.b16 %v714, %v713
    %v724 = vsel %vm526, %v683, 0
    %726 = vmatprep.subr.bf16.mxu0 0
    %727 = vmatpush1.bf16.msra.mxu0 %v715
    %728 = vmatprep.subr.bf16.mxu0 0
    %729 = vmatpush1.bf16.msra.mxu0 %v716
    %730 = vmatprep.subr.bf16.mxu0 0
    %731 = vmatpush1.bf16.msra.mxu0 %v717
    %732 = vmatprep.subr.bf16.mxu0 0
    %733 = vmatpush1.bf16.msra.mxu0 %v718
    %734 = vmatprep.subr.bf16.mxu0 0
    %735 = vmatpush1.bf16.msra.mxu0 0
    %736 = vmatprep.subr.bf16.mxu0 0
    %737 = vmatpush1.bf16.msra.mxu0 0
    %738 = vmatprep.subr.bf16.mxu0 0
    %739 = vmatpush1.bf16.msra.mxu0 0
    %740 = vmatprep.subr.bf16.mxu0 0
    %741 = vmatpush1.bf16.msra.mxu0 0
    %742 = vmatprep.subr.bf16.mxu0 0
    %743 = vmatpush1.bf16.msra.mxu0 0
    %744 = vmatprep.subr.bf16.mxu0 0
    %745 = vmatpush1.bf16.msra.mxu0 0
    %746 = vmatprep.subr.bf16.mxu0 0
    %747 = vmatpush1.bf16.msra.mxu0 0
    %748 = vmatprep.subr.bf16.mxu0 0
    %749 = vmatpush1.bf16.msra.mxu0 0
    %750 = vmatprep.subr.bf16.mxu0 0
    %751 = vmatpush1.bf16.msra.mxu0 0
    %752 = vmatprep.subr.bf16.mxu0 0
    %753 = vmatpush1.bf16.msra.mxu0 0
    %754 = vmatprep.subr.bf16.mxu0 0
    %755 = vmatpush1.bf16.msra.mxu0 0
    %756 = vmatprep.subr.bf16.mxu0 0
    %757 = vmatpush1.bf16.msra.mxu0 0
    %758 = vmatprep.mubr.bf16.mxu0 0
    %759 = vmatmul.mubr.bf16.gmra.mrb[0].mxu0 %v724
    %v760 = vpop.f32.mrb[0].mxu0
    %v761 = vadd.f32 %v697, %v760
    %v762 = vpop.f32.mrb[0].mxu0
    %v763 = vpop.f32.mrb[0].mxu0
    %v764 = vpop.f32.mrb[0].mxu0
    %765 = vdwg.mxu0
    %v766 = vmax.f32 %v761, 0.0
    %v767 = vpack.c.bf16 %v766, %v766
    %v768 = vld [vmem:[%s13] sm:$0xf]
    %v769 = vld [vmem:[%s13 + $0x4] sm:$0xf]
    %v770 = vld [vmem:[%s13 + $0x8] sm:$0xf]
    %v771 = vld [vmem:[%s13 + $0xc] sm:$0xf]
    %v772 = vld [vmem:[%s13 + $0x10] sm:$0xf]
    %v773 = vld [vmem:[%s13 + $0x14] sm:$0xf]
    %v774 = vld [vmem:[%s13 + $0x18] sm:$0xf]
    %v775 = vld [vmem:[%s13 + $0x1c] sm:$0xf]
    %v776 = vld [vmem:[%s14] sm:$0x1]
    %v778 = vlaneseq
    %v779 = vshrl.u32 %v778, 7
    %v780 = vsub.s32 0, %v779
    %v781 = vrot.slane %v776, %v780
    %v791 = vunpack.c.l.b16 %v768
    %v792 = vunpack.c.l.b16 %v769
    %v793 = vunpack.c.l.b16 %v770
    %v794 = vunpack.c.l.b16 %v771
    %v795 = vunpack.c.l.b16 %v772
    %v796 = vunpack.c.l.b16 %v773
    %v797 = vunpack.c.l.b16 %v774
    %v798 = vunpack.c.l.b16 %v775
    %v799 = vpack.c.b16 %v792, %v791
    %v800 = vpack.c.b16 %v794, %v793
    %v801 = vpack.c.b16 %v796, %v795
    %v802 = vpack.c.b16 %v798, %v797
    %v808 = vsel %vm526, %v767, 0
    %810 = vmatprep.subr.bf16.mxu0 0
    %811 = vmatpush1.bf16.msra.mxu0 %v799
    %812 = vmatprep.subr.bf16.mxu0 0
    %813 = vmatpush1.bf16.msra.mxu0 %v800
    %814 = vmatprep.subr.bf16.mxu0 0
    %815 = vmatpush1.bf16.msra.mxu0 %v801
    %816 = vmatprep.subr.bf16.mxu0 0
    %817 = vmatpush1.bf16.msra.mxu0 %v802
    %818 = vmatprep.subr.bf16.mxu0 0
    %819 = vmatpush1.bf16.msra.mxu0 0
    %820 = vmatprep.subr.bf16.mxu0 0
    %821 = vmatpush1.bf16.msra.mxu0 0
    %822 = vmatprep.subr.bf16.mxu0 0
    %823 = vmatpush1.bf16.msra.mxu0 0
    %824 = vmatprep.subr.bf16.mxu0 0
    %825 = vmatpush1.bf16.msra.mxu0 0
    %826 = vmatprep.subr.bf16.mxu0 0
    %827 = vmatpush1.bf16.msra.mxu0 0
    %828 = vmatprep.subr.bf16.mxu0 0
    %829 = vmatpush1.bf16.msra.mxu0 0
    %830 = vmatprep.subr.bf16.mxu0 0
    %831 = vmatpush1.bf16.msra.mxu0 0
    %832 = vmatprep.subr.bf16.mxu0 0
    %833 = vmatpush1.bf16.msra.mxu0 0
    %834 = vmatprep.subr.bf16.mxu0 0
    %835 = vmatpush1.bf16.msra.mxu0 0
    %836 = vmatprep.subr.bf16.mxu0 0
    %837 = vmatpush1.bf16.msra.mxu0 0
    %838 = vmatprep.subr.bf16.mxu0 0
    %839 = vmatpush1.bf16.msra.mxu0 0
    %840 = vmatprep.subr.bf16.mxu0 0
    %841 = vmatpush1.bf16.msra.mxu0 0
    %842 = vmatprep.mubr.bf16.mxu0 0
    %843 = vmatmul.mubr.bf16.gmra.mrb[0].mxu0 %v808
    %v844 = vpop.f32.mrb[0].mxu0
    %v845 = vadd.f32 %v781, %v844
    %v846 = vpop.f32.mrb[0].mxu0
    %v847 = vpop.f32.mrb[0].mxu0
    %v848 = vpop.f32.mrb[0].mxu0
    %849 = vdwg.mxu0
    %v850 = vmax.f32 %v845, 0.0
    %v851 = vpack.c.bf16 %v850, %v850
    %v852 = vld [vmem:[#allocation13] sm:$0xf]
    %v853 = vld [vmem:[#allocation13 + $0x4] sm:$0xf]
    %v854 = vld [vmem:[#allocation13 + $0x8] sm:$0xf]
    %v855 = vld [vmem:[#allocation13 + $0xc] sm:$0xf]
    %v856 = vld [vmem:[%s16] sm:$0x1]
    %v858 = vlaneseq
    %v859 = vshrl.u32 %v858, 7
    %v860 = vsub.s32 0, %v859
    %v861 = vrot.slane %v856, %v860
    %v867 = vunpack.c.l.b16 %v852
    %v868 = vunpack.c.l.b16 %v853
    %v869 = vunpack.c.l.b16 %v854
    %v870 = vunpack.c.l.b16 %v855
    %v871 = vpack.c.b16 %v868, %v867
    %v872 = vpack.c.b16 %v870, %v869
    %vm875 = vcmask 261120
    %v877 = vsel %vm875, %v851, 0
    %879 = vmatprep.subr.bf16.mxu0 0
    %880 = vmatpush1.bf16.msra.mxu0 %v871
    %881 = vmatprep.subr.bf16.mxu0 0
    %882 = vmatpush1.bf16.msra.mxu0 %v872
    %883 = vmatprep.subr.bf16.mxu0 0
    %884 = vmatpush1.bf16.msra.mxu0 0
    %885 = vmatprep.subr.bf16.mxu0 0
    %886 = vmatpush1.bf16.msra.mxu0 0
    %887 = vmatprep.subr.bf16.mxu0 0
    %888 = vmatpush1.bf16.msra.mxu0 0
    %889 = vmatprep.subr.bf16.mxu0 0
    %890 = vmatpush1.bf16.msra.mxu0 0
    %891 = vmatprep.subr.bf16.mxu0 0
    %892 = vmatpush1.bf16.msra.mxu0 0
    %893 = vmatprep.subr.bf16.mxu0 0
    %894 = vmatpush1.bf16.msra.mxu0 0
    %895 = vmatprep.subr.bf16.mxu0 0
    %896 = vmatpush1.bf16.msra.mxu0 0
    %897 = vmatprep.subr.bf16.mxu0 0
    %898 = vmatpush1.bf16.msra.mxu0 0
    %899 = vmatprep.subr.bf16.mxu0 0
    %900 = vmatpush1.bf16.msra.mxu0 0
    %901 = vmatprep.subr.bf16.mxu0 0
    %902 = vmatpush1.bf16.msra.mxu0 0
    %903 = vmatprep.subr.bf16.mxu0 0
    %904 = vmatpush1.bf16.msra.mxu0 0
    %905 = vmatprep.subr.bf16.mxu0 0
    %906 = vmatpush1.bf16.msra.mxu0 0
    %907 = vmatprep.subr.bf16.mxu0 0
    %908 = vmatpush1.bf16.msra.mxu0 0
    %909 = vmatprep.subr.bf16.mxu0 0
    %910 = vmatpush1.bf16.msra.mxu0 0
    %911 = vmatprep.mubr.bf16.mxu0 0
    %912 = vmatmul.mubr.bf16.gmra.mrb[0].mxu0 %v877
    %v913 = vpop.f32.mrb[0].mxu0
    %v914 = vadd.f32 %v861, %v913
    %v915 = vpop.f32.mrb[0].mxu0
    %v916 = vpop.f32.mrb[0].mxu0
    %v917 = vpop.f32.mrb[0].mxu0
    %918 = vdwg.mxu0
    %v919 = vpack.c.bf16 %v914, %v914
    %v920 = vld [vmem:[%s17] sm:$0xf]
    %v921 = vld [vmem:[%s17 + $0x4] sm:$0xf]
    %v922 = vld [vmem:[%s17 + $0x8] sm:$0xf]
    %v923 = vld [vmem:[%s17 + $0xc] sm:$0xf]
    %v924 = vld [vmem:[%s17 + $0x10] sm:$0xf]
    %v925 = vld [vmem:[%s17 + $0x14] sm:$0xf]
    %v926 = vld [vmem:[%s17 + $0x18] sm:$0xf]
    %v927 = vld [vmem:[%s17 + $0x1c] sm:$0xf]
    %v928 = vld [vmem:[%s18] sm:$0x1]
    %v930 = vlaneseq
    %v931 = vshrl.u32 %v930, 7
    %v932 = vsub.s32 0, %v931
    %v933 = vrot.slane %v928, %v932
    %v943 = vunpack.c.l.b16 %v920
    %v944 = vunpack.c.l.b16 %v921
    %v945 = vunpack.c.l.b16 %v922
    %v946 = vunpack.c.l.b16 %v923
    %v947 = vunpack.c.l.b16 %v924
    %v948 = vunpack.c.l.b16 %v925
    %v949 = vunpack.c.l.b16 %v926
    %v950 = vunpack.c.l.b16 %v927
    %v951 = vpack.c.b16 %v944, %v943
    %v952 = vpack.c.b16 %v946, %v945
    %v953 = vpack.c.b16 %v948, %v947
    %v954 = vpack.c.b16 %v950, %v949
    %v960 = vsel %vm526, %v919, 0
    %962 = vmatprep.subr.bf16.mxu0 0
    %963 = vmatpush1.bf16.msra.mxu0 %v951
    %964 = vmatprep.subr.bf16.mxu0 0
    %965 = vmatpush1.bf16.msra.mxu0 %v952
    %966 = vmatprep.subr.bf16.mxu0 0
    %967 = vmatpush1.bf16.msra.mxu0 %v953
    %968 = vmatprep.subr.bf16.mxu0 0
    %969 = vmatpush1.bf16.msra.mxu0 %v954
    %970 = vmatprep.subr.bf16.mxu0 0
    %971 = vmatpush1.bf16.msra.mxu0 0
    %972 = vmatprep.subr.bf16.mxu0 0
    %973 = vmatpush1.bf16.msra.mxu0 0
    %974 = vmatprep.subr.bf16.mxu0 0
    %975 = vmatpush1.bf16.msra.mxu0 0
    %976 = vmatprep.subr.bf16.mxu0 0
    %977 = vmatpush1.bf16.msra.mxu0 0
    %978 = vmatprep.subr.bf16.mxu0 0
    %979 = vmatpush1.bf16.msra.mxu0 0
    %980 = vmatprep.subr.bf16.mxu0 0
    %981 = vmatpush1.bf16.msra.mxu0 0
    %982 = vmatprep.subr.bf16.mxu0 0
    %983 = vmatpush1.bf16.msra.mxu0 0
    %984 = vmatprep.subr.bf16.mxu0 0
    %985 = vmatpush1.bf16.msra.mxu0 0
    %986 = vmatprep.subr.bf16.mxu0 0
    %987 = vmatpush1.bf16.msra.mxu0 0
    %988 = vmatprep.subr.bf16.mxu0 0
    %989 = vmatpush1.bf16.msra.mxu0 0
    %990 = vmatprep.subr.bf16.mxu0 0
    %991 = vmatpush1.bf16.msra.mxu0 0
    %992 = vmatprep.subr.bf16.mxu0 0
    %993 = vmatpush1.bf16.msra.mxu0 0
    %994 = vmatprep.mubr.bf16.mxu0 0
    %995 = vmatmul.mubr.bf16.gmra.mrb[0].mxu0 %v960
    %v996 = vpop.f32.mrb[0].mxu0
    %v997 = vadd.f32 %v933, %v996
    %v998 = vpop.f32.mrb[0].mxu0
    %v999 = vpop.f32.mrb[0].mxu0
    %v1000 = vpop.f32.mrb[0].mxu0
    %1001 = vdwg.mxu0
    %v1002 = vtanh.pop %v997
    %v1003 = vmul.f32 %v1002, 0.15
    %1004 = vst [vmem:[#allocation14] sm:$0xff] %v1003
    // Predicated region
    $region106: #{tpu_custom_call.1} parent=1 // pred_check
      _
    $region107: #{tpu_custom_call.1} parent=1 // pred_check_branch
      %1006 = sbr.rel (0) target = $region109
    $region108: #{tpu_custom_call.1} parent=1 // pred_region
      %s1008 = ssub.s32 128, 128
      %1009 = vsyncadd [#allocation4], %s1008
      %s1011 = sshll.u32 [#allocation14], 4
      %s1012 = int_to_ptr.vmem [resolvable:$true] %s1011
      %1014 = dma.vmem_to_hbm [thread:$0]  %s1012, 128, %s19, [#allocation4]
    $region109: #{tpu_custom_call.1} parent=1 // pred_fallthru
      _
    // Predicated region
    $region110: #{tpu_custom_call.1} parent=1 // pred_check
      _
    $region111: #{tpu_custom_call.1} parent=1 // pred_check_branch
      %1016 = sbr.rel (0) target = $region113
    $region112: #{tpu_custom_call.1} parent=1 // pred_region
      %1017 = dma.done [#allocation4], 128
    $region113: #{tpu_custom_call.1} parent=1 // pred_fallthru
      _
    %1018 = vsyncpa [#allocation3], 1
    %1019 = vsyncpa [#allocation6], 1
    %1020 = vsyncpa [#allocation9], 1
    %1021 = vsyncpa [#allocation12], 1
    %1022 = vsyncpa [#allocation4], 1

</llo_original>
